<compile_context>
chip_gen: v5e
topology: v5e:2x2
jax: 0.10.0
libtpu: 0.0.40
codegen_flags: <defaults>
</compile_context>

<pallas_src>
import functools

import jax
import jax.numpy as jnp
from jax.experimental import pallas as pl
from jax.experimental.pallas import tpu as pltpu

_VMEM_LIMIT = 48 * 1024 * 1024  # safe on v5e/v6e (128 MiB phys) and v7x (64 MiB phys)


# ----------------------------------------------------------------------------
# Pallas kernel 1: batched GEMM + bias + optional residual + activation
#   (used by every 1x1 conv and by im2col'd strided spatial convs)
# ----------------------------------------------------------------------------
def _make_gemm_kernel(act, res_mode):
    has_res = res_mode != "none"

    def epilogue(acc, b_blk, r_blk):
        y = acc + b_blk.astype(jnp.float32)
        if has_res and res_mode == "pre_act":
            y = y + r_blk.astype(jnp.float32)
        if act == "relu":
            y = jnp.maximum(y, 0.0)
        elif act == "sigmoid":
            y = 0.5 * (jnp.tanh(0.5 * y) + 1.0)  # stable sigmoid via EUP tanh
        if has_res and res_mode == "post_act":
            y = y + r_blk.astype(jnp.float32)
        return y

    if not has_res:
        def kernel(x_ref, w_ref, b_ref, o_ref, acc_ref):
            k = pl.program_id(3)

            @pl.when(k == 0)
            def _():
                acc_ref[...] = jnp.zeros_like(acc_ref)

            acc_ref[...] += jnp.dot(x_ref[0], w_ref[0],
                                    preferred_element_type=jnp.float32)

            @pl.when(k == pl.num_programs(3) - 1)
            def _():
                o_ref[0] = epilogue(acc_ref[...], b_ref[0], None).astype(o_ref.dtype)

        return kernel

    def kernel(x_ref, w_ref, b_ref, r_ref, o_ref, acc_ref):
        k = pl.program_id(3)

        @pl.when(k == 0)
        def _():
            acc_ref[...] = jnp.zeros_like(acc_ref)

        acc_ref[...] += jnp.dot(x_ref[0], w_ref[0],
                                preferred_element_type=jnp.float32)

        @pl.when(k == pl.num_programs(3) - 1)
        def _():
            o_ref[0] = epilogue(acc_ref[...], b_ref[0], r_ref[0]).astype(o_ref.dtype)

    return kernel


def _pick_tile(dim, candidates):
    for c in candidates:
        if dim >= c and dim % c == 0:
            return c
    return dim  # full dim (always legal for BlockSpec)


def _batched_gemm(x, w, b, r=None, *, act, res_mode, out_dtype):
    """x: (G, M, K) bf16, w: (G, K, N) bf16, b: (G, 1, N) f32 -> (G, M, N)."""
    G, M, K = x.shape
    N = w.shape[2]

    tm = _pick_tile(M, (512, 256, 128, 64, 32, 16, 8))
    tn = _pick_tile(N, (512, 256, 128))
    tk = _pick_tile(K, (1024, 512, 256, 128))

    # keep >=2 parallel grid steps so both v7x TensorCores have work
    if G * (M // tm) * (N // tn) < 2:
        if tn >= 256 and N % (tn // 2) == 0:
            tn //= 2
        elif tm >= 16 and M % (tm // 2) == 0:
            tm //= 2

    grid = (G, M // tm, N // tn, K // tk)

    in_specs = [
        pl.BlockSpec((1, tm, tk), lambda g, i, j, k: (g, i, k)),
        pl.BlockSpec((1, tk, tn), lambda g, i, j, k: (g, k, j)),
        pl.BlockSpec((1, 1, tn), lambda g, i, j, k: (g, 0, j)),
    ]
    args = [x, w, b]
    if res_mode != "none":
        in_specs.append(pl.BlockSpec((1, tm, tn), lambda g, i, j, k: (g, i, j)))
        args.append(r)

    out_bytes = jnp.dtype(out_dtype).itemsize
    res_bytes = r.size * r.dtype.itemsize if res_mode != "none" else 0
    cost = pl.CostEstimate(
        flops=2 * G * M * K * N,
        transcendentals=G * M * N if act == "sigmoid" else 0,
        bytes_accessed=(x.size * x.dtype.itemsize + w.size * w.dtype.itemsize
                        + G * M * N * out_bytes + res_bytes),
    )

    return pl.pallas_call(
        _make_gemm_kernel(act, res_mode),
        out_shape=jax.ShapeDtypeStruct((G, M, N), out_dtype),
        grid_spec=pltpu.PrefetchScalarGridSpec(
            num_scalar_prefetch=0,
            grid=grid,
            in_specs=in_specs,
            out_specs=pl.BlockSpec((1, tm, tn), lambda g, i, j, k: (g, i, j)),
            scratch_shapes=[pltpu.VMEM((tm, tn), jnp.float32)],
        ),
        compiler_params=pltpu.CompilerParams(
            dimension_semantics=("parallel", "parallel", "parallel", "arbitrary"),
            vmem_limit_bytes=_VMEM_LIMIT,
        ),
        cost_estimate=cost,
    )(*args)


# ----------------------------------------------------------------------------
# Pallas kernel 2: stride-1 KxK conv with in-kernel tap accumulation (no im2col)
# ----------------------------------------------------------------------------
def _make_tap_kernel(KH, KW, act):
    def kernel(x_ref, w_ref, b_ref, o_ref):
        Ho, Wo, to = o_ref.shape[1], o_ref.shape[2], o_ref.shape[3]
        Cg = x_ref.shape[3]
        xfull = x_ref[0]                                   # (Hp, Wp, Cg)
        acc = jnp.zeros((Ho * Wo, to), jnp.float32)
        for kh in range(KH):
            for kw in range(KW):
                xt = xfull[kh:kh + Ho, kw:kw + Wo, :].reshape(Ho * Wo, Cg)
                acc = acc + jnp.dot(xt, w_ref[kh * KW + kw, 0],
                                    preferred_element_type=jnp.float32)
        y = acc + b_ref[0].astype(jnp.float32)
        if act == "relu":
            y = jnp.maximum(y, 0.0)
        elif act == "sigmoid":
            y = 0.5 * (jnp.tanh(0.5 * y) + 1.0)
        o_ref[0] = y.reshape(Ho, Wo, to).astype(o_ref.dtype)

    return kernel


def _conv_taps(xp, w_taps, b, *, KH, KW, act, out_dtype):
    """xp: (N, Hp, Wp, C) bf16 (already padded); w_taps: (T, Gf, Cgf, Ogf) bf16."""
    N, Hp, Wp, C = xp.shape
    T, Gf, Cgf, Ogf = w_taps.shape
    assert C == Gf * Cgf and T == KH * KW
    Ho, Wo = Hp - KH + 1, Wp - KW + 1

    if Ogf > 256 and Ogf % 256 == 0:
        to = 256
    elif Ogf > 128 and Ogf % 128 == 0:
        to = 128
    else:
        to = Ogf
    nj = Ogf // to

    cost = pl.CostEstimate(
        flops=2 * N * Ho * Wo * T * Cgf * Ogf * Gf,
        transcendentals=N * Ho * Wo * Ogf * Gf if act == "sigmoid" else 0,
        bytes_accessed=(xp.size * xp.dtype.itemsize
                        + w_taps.size * w_taps.dtype.itemsize
                        + N * Ho * Wo * Gf * Ogf * jnp.dtype(out_dtype).itemsize),
    )

    return pl.pallas_call(
        _make_tap_kernel(KH, KW, act),
        out_shape=jax.ShapeDtypeStruct((N, Ho, Wo, Gf * Ogf), out_dtype),
        grid_spec=pltpu.PrefetchScalarGridSpec(
            num_scalar_prefetch=0,
            grid=(N, Gf, nj),
            in_specs=[
                pl.BlockSpec((1, Hp, Wp, Cgf), lambda n, g, j: (n, 0, 0, g)),
                pl.BlockSpec((T, 1, Cgf, to), lambda n, g, j: (0, g, 0, j)),
                pl.BlockSpec((1, 1, to), lambda n, g, j: (g, 0, j)),
            ],
            out_specs=pl.BlockSpec((1, Ho, Wo, to),
                                   lambda n, g, j: (n, 0, 0, g * nj + j)),
        ),
        compiler_params=pltpu.CompilerParams(
            dimension_semantics=("parallel", "parallel", "parallel"),
            vmem_limit_bytes=_VMEM_LIMIT,
        ),
        cost_estimate=cost,
    )(xp, w_taps, b)


# ----------------------------------------------------------------------------
# Conv wrappers (NHWC, bf16 activations).  Each wrapper is jitted so repeated
# identical blocks reuse one compiled program and the glue fuses with the kernel.
# ----------------------------------------------------------------------------
def _im2col_nhwc(x, KH, KW, stride, padding):
    N, H, W, C = x.shape
    Ho = (H + 2 * padding - KH) // stride + 1
    Wo = (W + 2 * padding - KW) // stride + 1
    xp = jnp.pad(x, ((0, 0), (padding, padding), (padding, padding), (0, 0)))
    taps = []
    for kh in range(KH):
        for kw in range(KW):
            taps.append(xp[:, kh:kh + (Ho - 1) * stride + 1:stride,
                           kw:kw + (Wo - 1) * stride + 1:stride, :])
    p = jnp.stack(taps, axis=0)            # (T, N, Ho, Wo, C)
    p = p.transpose(1, 2, 3, 4, 0)         # (N, Ho, Wo, C, T)  -> K order (c, t)
    return p.reshape(N * Ho * Wo, C * KH * KW), Ho, Wo


@functools.partial(jax.jit,
                   static_argnames=("stride", "act", "res_mode", "out_dtype"))
def conv1x1(x, p, res=None, *, stride=1, act="none", res_mode="none",
            out_dtype=jnp.bfloat16):
    """Pointwise conv; NHWC input is already GEMM-ready (no im2col, no transposes)."""
    if res is None:
        res_mode = "none"
    if stride > 1:
        x = x[:, ::stride, ::stride, :]
    N, H, W, C = x.shape
    O = p["w"].shape[1]
    M = N * H * W
    xg = x.reshape(1, M, C)
    wg = p["w"].reshape(1, C, O)
    bg = p["b"].reshape(1, 1, O)
    rg = None if res is None else res.reshape(1, M, O)
    y = _batched_gemm(xg, wg, bg, rg, act=act, res_mode=res_mode,
                      out_dtype=out_dtype)
    return y.reshape(N, H, W, O)


@functools.partial(jax.jit, static_argnames=("KH", "KW", "act", "out_dtype"))
def _spatial_conv(xp, w_taps, b, *, KH, KW, act="none", out_dtype=jnp.bfloat16):
    """Stride-1 KxK conv on a pre-padded NHWC tensor."""
    N, Hp, Wp, C = xp.shape
    T, Gf, Cgf, Ogf = w_taps.shape
    Ho, Wo = Hp - KH + 1, Wp - KW + 1
    if Ho % 8 == 0 and Wo % 8 == 0:
        return _conv_taps(xp, w_taps, b, KH=KH, KW=KW, act=act,
                          out_dtype=out_dtype)
    # tiny / sublane-unaligned spatial dims: fall back to im2col + batched GEMM
    patches, _, _ = _im2col_nhwc(xp, KH, KW, 1, 0)
    M = N * Ho * Wo
    xg = patches.reshape(M, Gf, Cgf * T).transpose(1, 0, 2)
    wi = w_taps.transpose(1, 2, 0, 3).reshape(Gf, Cgf * T, Ogf)
    y = _batched_gemm(xg, wi, b, act=act, res_mode="none", out_dtype=out_dtype)
    return y.transpose(1, 0, 2).reshape(N, Ho, Wo, Gf * Ogf)


def conv_spatial(x, p, *, KH, KW, padding, act="none", out_dtype=jnp.bfloat16):
    xp = jnp.pad(x, ((0, 0), (padding, padding), (padding, padding), (0, 0)))
    return _spatial_conv(xp, p["w"], p["b"], KH=KH, KW=KW, act=act,
                         out_dtype=out_dtype)


@functools.partial(jax.jit,
                   static_argnames=("KH", "KW", "stride", "padding", "act"))
def conv_spatial_strided(x, p, *, KH, KW, stride, padding, act="none"):
    """Strided KxK conv via host-side im2col feeding the batched GEMM kernel."""
    N = x.shape[0]
    patches, Ho, Wo = _im2col_nhwc(x, KH, KW, stride, padding)
    Gf, Kgf, Ogf = p["w"].shape
    M = N * Ho * Wo
    xg = patches.reshape(M, Gf, Kgf).transpose(1, 0, 2)
    y = _batched_gemm(xg, p["w"], p["b"], act=act, res_mode="none",
                      out_dtype=jnp.bfloat16)
    return y.transpose(1, 0, 2).reshape(N, Ho, Wo, Gf * Ogf)


def _deconv2x(x, p):
    """ConvTranspose2d(k=4, s=2, p=1) as 4 sub-pixel-phase 2x2 stride-1 convs."""
    N, H, W, C = x.shape
    ys = []
    for py in range(2):
        for px in range(2):
            pad_h = (1, 0) if py == 0 else (0, 1)
            pad_w = (1, 0) if px == 0 else (0, 1)
            xp = jnp.pad(x, ((0, 0), pad_h, pad_w, (0, 0)))
            ys.append(_spatial_conv(xp, p["w%d%d" % (py, px)], p["b"],
                                    KH=2, KW=2, act="none",
                                    out_dtype=jnp.bfloat16))
    t = jnp.stack(ys, axis=0).reshape(2, 2, N, H, W, C)
    t = t.transpose(2, 3, 0, 4, 1, 5).reshape(N, 2 * H, 2 * W, C)
    return t


# ----------------------------------------------------------------------------
# Deterministic synthetic parameters, pre-packed into GEMM/tap-ready bf16 form
# ----------------------------------------------------------------------------
class KeyGen:
    def __init__(self, seed):
        self._key = jax.random.PRNGKey(seed)

    def __call__(self):
        self._key, sub = jax.random.split(self._key)
        return sub


def _he(kg, cout, cin_g, kh, kw):
    fan_in = cin_g * kh * kw
    return jax.random.normal(kg(), (cout, cin_g, kh, kw), jnp.float32) * (2.0 / fan_in) ** 0.5


def _conv_bn(kg, cout, cin, kh, kw, groups=1):
    """Conv(bias=False) + eval-mode BatchNorm folded into (weight, bias)."""
    w = _he(kg, cout, cin // groups, kh, kw)
    gamma = 1.0 + 0.1 * jax.random.normal(kg(), (cout,), jnp.float32)
    beta = 0.1 * jax.random.normal(kg(), (cout,), jnp.float32)
    mean = 0.1 * jax.random.normal(kg(), (cout,), jnp.float32)
    var = 1.0 + 0.1 * jax.random.uniform(kg(), (cout,), jnp.float32)
    scale = gamma / jnp.sqrt(var + 1e-5)
    return w * scale[:, None, None, None], beta - mean * scale


def _conv_bias(kg, cout, cin, kh, kw):
    return _he(kg, cout, cin, kh, kw), 0.01 * jax.random.normal(kg(), (cout,), jnp.float32)


def _gpf(groups, og):
    return min(groups, max(1, 128 // og))


def _pack_1x1(w, b):
    return {"w": w[:, :, 0, 0].T.astype(jnp.bfloat16),
            "b": b.astype(jnp.float32)}


def _pack_taps(w, b, groups=1, pad_out_to=None):
    """Per-tap, group-folded block-diagonal weights for the tap kernel."""
    O, Cg, KH, KW = w.shape
    if pad_out_to is not None and pad_out_to > O:
        w = jnp.concatenate([w, jnp.zeros((pad_out_to - O, Cg, KH, KW), w.dtype)], 0)
        b = jnp.concatenate([b, jnp.zeros((pad_out_to - O,), b.dtype)], 0)
        O = pad_out_to
    G = groups
    Og = O // G
    gpf = _gpf(G, Og)
    Gf = G // gpf
    T = KH * KW
    wt = w.reshape(G, Og, Cg, T).transpose(0, 3, 2, 1)      # (G, T, Cg, Og)
    wt = wt.reshape(Gf, gpf, T, Cg, Og)
    wf = jnp.zeros((T, Gf, gpf * Cg, gpf * Og), jnp.float32)
    for i in range(gpf):
        wf = wf.at[:, :, i * Cg:(i + 1) * Cg, i * Og:(i + 1) * Og].set(
            wt[:, i].transpose(1, 0, 2, 3))
    return {"w": wf.astype(jnp.bfloat16),
            "b": b.reshape(Gf, 1, gpf * Og).astype(jnp.float32)}


def _pack_im2col(w, b, groups=1):
    """Group-folded block-diagonal im2col weights for the batched GEMM kernel."""
    O, Cg, KH, KW = w.shape
    G = groups
    Og = O // G
    gpf = _gpf(G, Og)
    Gf = G // gpf
    Kg = Cg * KH * KW
    wm = w.reshape(G, Og, Kg).transpose(0, 2, 1).reshape(Gf, gpf, Kg, Og)
    wf = jnp.zeros((Gf, gpf * Kg, gpf * Og), jnp.float32)
    for i in range(gpf):
        wf = wf.at[:, i * Kg:(i + 1) * Kg, i * Og:(i + 1) * Og].set(wm[:, i])
    return {"w": wf.astype(jnp.bfloat16),
            "b": b.reshape(Gf, 1, gpf * Og).astype(jnp.float32)}


_KSEL = ((3, 1), (2, 0))  # transposed-conv kernel rows used by output phase 0 / 1


def _pack_deconv(w_t, b):
    """w_t: (Cin, Cout, 4, 4) PyTorch ConvTranspose2d weight -> 4 phase tap packs."""
    out = {"b": b.reshape(1, 1, -1).astype(jnp.float32)}
    for py in range(2):
        for px in range(2):
            taps = [w_t[:, :, _KSEL[py][dy], _KSEL[px][dx]]
                    for dy in range(2) for dx in range(2)]
            out["w%d%d" % (py, px)] = jnp.stack(taps, 0)[:, None].astype(jnp.bfloat16)
    return out


def _bottleneck_params(kg, inplanes, planes, stride, downsample):
    width = planes * 2  # int(planes * 4/64) * 32 for resnext50_32x4d
    w1, b1 = _conv_bn(kg, width, inplanes, 1, 1)
    w2, b2 = _conv_bn(kg, width, width, 3, 3, groups=32)
    w3, b3 = _conv_bn(kg, planes * 4, width, 1, 1)
    p = {"conv1": _pack_1x1(w1, b1), "conv3": _pack_1x1(w3, b3)}
    if stride == 1:
        p["conv2"] = _pack_taps(w2, b2, groups=32)
    else:
        p["conv2s"] = _pack_im2col(w2, b2, groups=32)
    if downsample:
        wd, bd = _conv_bn(kg, planes * 4, inplanes, 1, 1)
        p["down"] = _pack_1x1(wd, bd)
    return p


def _layer_params(kg, inplanes, planes, blocks, stride):
    layer = [_bottleneck_params(kg, inplanes, planes, stride, True)]
    for _ in range(blocks - 1):
        layer.append(_bottleneck_params(kg, planes * 4, planes, 1, False))
    return layer


def _decoder_params(kg, cin, cout):
    mid = cin // 4
    w1, b1 = _conv_bias(kg, mid, cin, 1, 1)
    wt = jax.random.normal(kg(), (mid, mid, 4, 4), jnp.float32) * (2.0 / (mid * 16)) ** 0.5
    bt = 0.01 * jax.random.normal(kg(), (mid,), jnp.float32)
    w2, b2 = _conv_bias(kg, cout, mid, 1, 1)
    return {"conv1": _pack_1x1(w1, b1),
            "deconv": _pack_deconv(wt, bt),
            "conv2": _pack_1x1(w2, b2)}


def make_params(seed=0, n_classes=1):
    kg = KeyGen(seed)
    w0, b0 = _conv_bn(kg, 64, 3, 7, 7)
    lw0, lb0 = _conv_bias(kg, 128, 256, 3, 3)
    lw1, lb1 = _conv_bias(kg, n_classes, 128, 3, 3)
    return {
        "conv1": _pack_im2col(w0, b0),
        "layer1": _layer_params(kg, 64, 64, 3, 1),
        "layer2": _layer_params(kg, 256, 128, 4, 2),
        "layer3": _layer_params(kg, 512, 256, 6, 2),
        "layer4": _layer_params(kg, 1024, 512, 3, 2),
        "decoder4": _decoder_params(kg, 2048, 1024),
        "decoder3": _decoder_params(kg, 1024, 512),
        "decoder2": _decoder_params(kg, 512, 256),
        "decoder1": _decoder_params(kg, 256, 256),
        "lc0": _pack_taps(lw0, lb0),
        "lc1": _pack_taps(lw1, lb1, pad_out_to=128),  # lane-dense final conv
    }


# ----------------------------------------------------------------------------
# Forward pass (NHWC bf16 activations)
# ----------------------------------------------------------------------------
def _bottleneck_fwd(x, p):
    stride = 1 if "conv2" in p else 2
    identity = x
    out = conv1x1(x, p["conv1"], act="relu")
    if stride == 1:
        out = conv_spatial(out, p["conv2"], KH=3, KW=3, padding=1, act="relu")
    else:
        out = conv_spatial_strided(out, p["conv2s"], KH=3, KW=3, stride=2,
                                   padding=1, act="relu")
    if "down" in p:
        identity = conv1x1(x, p["down"], stride=stride, act="none")
    # residual add fused before the final ReLU inside the Pallas epilogue
    return conv1x1(out, p["conv3"], identity, act="relu", res_mode="pre_act")


def _decoder_fwd(x, p, skip=None):
    out = conv1x1(x, p["conv1"], act="relu")
    out = _deconv2x(out, p["deconv"])
    if skip is not None:
        # UNet skip add (`decoder(x) + skip`) fused after the ReLU inside the kernel
        out = conv1x1(out, p["conv2"], skip, act="relu", res_mode="post_act")
    else:
        out = conv1x1(out, p["conv2"], act="relu")
    return out


def resnext_unet_forward(P, x, n_classes=1):
    # single layout change: NCHW f32 -> NHWC bf16
    x = jnp.transpose(x, (0, 2, 3, 1)).astype(jnp.bfloat16)

    # encoder0 = conv1 + bn1 + relu (maxpool is NOT part of this UNet's encoders)
    x = conv_spatial_strided(x, P["conv1"], KH=7, KW=7, stride=2, padding=3,
                             act="relu")
    e1 = x
    for blk in P["layer1"]:
        e1 = _bottleneck_fwd(e1, blk)
    e2 = e1
    for blk in P["layer2"]:
        e2 = _bottleneck_fwd(e2, blk)
    e3 = e2
    for blk in P["layer3"]:
        e3 = _bottleneck_fwd(e3, blk)
    e4 = e3
    for blk in P["layer4"]:
        e4 = _bottleneck_fwd(e4, blk)

    d4 = _decoder_fwd(e4, P["decoder4"], skip=e3)
    d3 = _decoder_fwd(d4, P["decoder3"], skip=e2)
    d2 = _decoder_fwd(d3, P["decoder2"], skip=e1)
    d1 = _decoder_fwd(d2, P["decoder1"], skip=None)

    out = conv_spatial(d1, P["lc0"], KH=3, KW=3, padding=1, act="relu")
    out = conv_spatial(out, P["lc1"], KH=3, KW=3, padding=1, act="sigmoid",
                       out_dtype=jnp.float32)
    out = out[..., :n_classes]                 # drop lane-padding channels
    return jnp.transpose(out, (0, 3, 1, 2))    # back to NCHW


# ----------------------------------------------------------------------------
if __name__ == "__main__":
    params = make_params(seed=0, n_classes=1)
    x = jax.random.normal(jax.random.PRNGKey(0), (2, 3, 64, 64), jnp.float32)

    out = resnext_unet_forward(params, x)
    out = jax.block_until_ready(out)

    assert out.shape == (2, 1, 64, 64), out.shape
    assert bool(jnp.all(jnp.isfinite(out)))
    assert bool(jnp.all((out >= 0.0) & (out <= 1.0)))  # sigmoid output range
    print("KERNEL_OK")
</pallas_src>

<mosaic_0001>
module attributes {stable_mosaic.version = 11 : i64} {
  func.func @kernel(%arg0: i32, %arg1: i32, %arg2: i32, %arg3: i32, %arg4: memref<1x512x147xbf16, #tpu.memory_space<vmem>>, %arg5: memref<1x147x64xbf16, #tpu.memory_space<vmem>>, %arg6: memref<1x1x64xf32, #tpu.memory_space<vmem>>, %arg7: memref<1x512x64xbf16, #tpu.memory_space<vmem>>, %arg8: memref<512x64xf32, #tpu.memory_space<vmem>>) attributes {dimension_semantics = [#tpu.dimension_semantics<parallel>, #tpu.dimension_semantics<parallel>, #tpu.dimension_semantics<parallel>, #tpu.dimension_semantics<arbitrary>], iteration_bounds = array<i64: 1, 4, 1, 1>, scalar_prefetch = 0 : i64, scratch_operands = 1 : i64, tpu.core_type = #tpu.core_type<tc>, window_params = [{transform_indices = @transform_0, window_bounds = array<i64: 1, 512, 147>}, {transform_indices = @transform_1, window_bounds = array<i64: 1, 147, 64>}, {transform_indices = @transform_2, window_bounds = array<i64: 1, 1, 64>}, {transform_indices = @transform_3, window_bounds = array<i64: 1, 512, 64>}]} {
    %c0_i32 = arith.constant 0 : i32
    %0 = arith.cmpi eq, %arg3, %c0_i32 : i32
    %1 = arith.extui %0 : i1 to i32
    %c0_i32_0 = arith.constant 0 : i32
    %2 = arith.cmpi ne, %1, %c0_i32_0 : i32
    scf.if %2 {
      %cst_12 = arith.constant 0.000000e+00 : f32
      %14 = vector.broadcast %cst_12 : f32 to vector<512x64xf32>
      %c0_13 = arith.constant 0 : index
      %c0_14 = arith.constant 0 : index
      %15 = vector.load %arg8[%c0_13, %c0_14] : memref<512x64xf32, #tpu.memory_space<vmem>>, vector<512x64xf32>
      tpu.vector_store %arg8[%c0_13, %c0_14], %14 {strides = array<i32>} : memref<512x64xf32, #tpu.memory_space<vmem>>, vector<512x64xf32>,
    } else {
    }
    %c0 = arith.constant 0 : index
    %c0_1 = arith.constant 0 : index
    %3 = vector.load %arg8[%c0, %c0_1] : memref<512x64xf32, #tpu.memory_space<vmem>>, vector<512x64xf32>
    %c0_2 = arith.constant 0 : index
    %c0_3 = arith.constant 0 : index
    %c0_4 = arith.constant 0 : index
    %4 = vector.load %arg4[%c0_2, %c0_3, %c0_4] : memref<1x512x147xbf16, #tpu.memory_space<vmem>>, vector<1x512x147xbf16>
    %5 = vector.shape_cast %4 : vector<1x512x147xbf16> to vector<512x147xbf16>
    %c0_5 = arith.constant 0 : index
    %c0_6 = arith.constant 0 : index
    %c0_7 = arith.constant 0 : index
    %6 = vector.load %arg5[%c0_5, %c0_6, %c0_7] : memref<1x147x64xbf16, #tpu.memory_space<vmem>>, vector<1x147x64xbf16>
    %7 = vector.shape_cast %6 : vector<1x147x64xbf16> to vector<147x64xbf16>
    %cst = arith.constant dense<0.000000e+00> : vector<512x64xf32>
    %8 = tpu.matmul %5, %7, %cst {dimension_numbers = #tpu.dot_dimension_numbers<[1], [0], [0], [1], [0, 0, 1, 1], [], []>} : vector<512x147xbf16>, vector<147x64xbf16>, vector<512x64xf32> -> vector<512x64xf32>
    %9 = arith.addf %3, %8 : vector<512x64xf32>
    %c0_8 = arith.constant 0 : index
    %c0_9 = arith.constant 0 : index
    %10 = vector.load %arg8[%c0_8, %c0_9] : memref<512x64xf32, #tpu.memory_space<vmem>>, vector<512x64xf32>
    tpu.vector_store %arg8[%c0_8, %c0_9], %9 {strides = array<i32>} : memref<512x64xf32, #tpu.memory_space<vmem>>, vector<512x64xf32>,
    %c0_i32_10 = arith.constant 0 : i32
    %11 = arith.cmpi eq, %arg3, %c0_i32_10 : i32
    %12 = arith.extui %11 : i1 to i32
    %c0_i32_11 = arith.constant 0 : i32
    %13 = arith.cmpi ne, %12, %c0_i32_11 : i32
    scf.if %13 {
      %c0_12 = arith.constant 0 : index
      %c0_13 = arith.constant 0 : index
      %14 = vector.load %arg8[%c0_12, %c0_13] : memref<512x64xf32, #tpu.memory_space<vmem>>, vector<512x64xf32>
      %c0_14 = arith.constant 0 : index
      %c0_15 = arith.constant 0 : index
      %c0_16 = arith.constant 0 : index
      %15 = vector.load %arg6[%c0_14, %c0_15, %c0_16] : memref<1x1x64xf32, #tpu.memory_space<vmem>>, vector<1x1x64xf32>
      %16 = vector.shape_cast %15 : vector<1x1x64xf32> to vector<1x64xf32>
      %17 = vector.broadcast %16 : vector<1x64xf32> to vector<512x64xf32>
      %18 = arith.addf %14, %17 : vector<512x64xf32>
      %cst_17 = arith.constant 0.000000e+00 : f32
      %19 = vector.broadcast %cst_17 : f32 to vector<512x64xf32>
      %20 = arith.maximumf %18, %19 : vector<512x64xf32>
      %21 = arith.truncf %20 : vector<512x64xf32> to vector<512x64xbf16>
      %c0_18 = arith.constant 0 : index
      %c0_19 = arith.constant 0 : index
      %c0_20 = arith.constant 0 : index
      %22 = vector.load %arg7[%c0_18, %c0_19, %c0_20] : memref<1x512x64xbf16, #tpu.memory_space<vmem>>, vector<1x512x64xbf16>
      %23 = vector.shape_cast %22 : vector<1x512x64xbf16> to vector<512x64xbf16>
      %24 = vector.shape_cast %21 : vector<512x64xbf16> to vector<1x512x64xbf16>
      tpu.vector_store %arg7[%c0_18, %c0_19, %c0_20], %24 {strides = array<i32>} : memref<1x512x64xbf16, #tpu.memory_space<vmem>>, vector<1x512x64xbf16>,
    } else {
    }
    return
  }
  func.func @transform_0(%arg0: i32, %arg1: i32, %arg2: i32, %arg3: i32) -> (i32, i32, i32) {
    %c0_i32 = arith.constant 0 : i32
    return %arg0, %arg1, %arg3 : i32, i32, i32
  }
  func.func @transform_1(%arg0: i32, %arg1: i32, %arg2: i32, %arg3: i32) -> (i32, i32, i32) {
    %c0_i32 = arith.constant 0 : i32
    return %arg0, %arg3, %arg2 : i32, i32, i32
  }
  func.func @transform_2(%arg0: i32, %arg1: i32, %arg2: i32, %arg3: i32) -> (i32, i32, i32) {
    %c0_i32 = arith.constant 0 : i32
    %c0_i32_0 = arith.constant 0 : i32
    return %arg0, %c0_i32, %arg2 : i32, i32, i32
  }
  func.func @transform_3(%arg0: i32, %arg1: i32, %arg2: i32, %arg3: i32) -> (i32, i32, i32) {
    %c0_i32 = arith.constant 0 : i32
    return %arg0, %arg1, %arg2 : i32, i32, i32
  }
}

</mosaic_0001>

<llo_original>
// kernel: conv_spatial_strided.1
$region0: #{conv_spatial_strided.1}
  #allocation0 [shape = 'u32[]', space=smem, size = 0x4, offset = 0x4, fixed_abs, tag = 'smem constant byte address 0x4 - core index']
  #allocation1 [shape = 'u32[72,128]{1,0:T(1,128)}', space=vmem, size = 0x9000, scoped, tag = 'internal scratch']
  #allocation2 [shape = 'f32[512,64]{1,0:T(8,128)}', space=vmem, size = 0x40000, scoped, tag = 'scratch operand']
  %s0 = inlined_call_operand.vmem [shape: bf16[1,2048,147], index: 0, kind: input, shape index: {}]
  %s1 = inlined_call_operand.vmem [shape: bf16[1,147,64], index: 1, kind: input, shape index: {}]
  %s2 = inlined_call_operand.vmem [shape: f32[1,1,64], index: 2, kind: input, shape index: {}]
  %s3 = inlined_call_operand.hbm [shape: bf16[1,2048,64], index: 3, kind: output, shape index: {}]
  %s4 = sld [smem:[#allocation0]]
  $region53: #{conv_spatial_strided.1} parent=0
    _
  %s6 = ssub.s32 1, %s4
  %s7 = scalar_select 0, %s6, %s4
  $region1: #{conv_spatial_strided.1} parent=0
    #allocation3 [shape = 'u8[262144]{0}', space=vmem, size = 0x40000, scoped, tag = 'output window, operand 0']
    #allocation4 [shape = 's32[2]{0}', space=sflag, size = 0x8, scoped, tag = 'scoped memory for conv_spatial_strided.1']
    %8 = vsyncpa [#allocation4], 0
    %s9 = scalar_lea.sflag [#allocation4], 1
    %10 = vsyncpa %s9, 0
    loop: start=0, step=1, limit=6
    $region2: #{conv_spatial_strided.1} parent=1 // loop_pre_header
      _
    $region3: #{conv_spatial_strided.1} parent=1 // loop_header
      %s12 = sphi 0, %s16
      %p13 = scmp.ge.s32.totalorder %s12, 6
      %s19 = sphi 0, %s45
      %s20 = sphi 0, %s41
      %s21 = sphi 0, %s37
      %s22 = sphi 0, %s33
      %s23 = sphi 0, %s19
      %s24 = sphi 0, %s20
      %s25 = sphi 0, %s21
      %s26 = sphi 0, %s22
      %s27 = sphi 0, %s23
      %s28 = sphi 0, %s24
      %s29 = sphi 0, %s25
      %s30 = sphi 0, %s26
      %s52 = sphi 0, %s54
      %s55 = sphi 0, %s52
      %s56 = sphi 0, %s55
      %s72 = sphi 0, %s56
      %s82 = sphi 0, %s84
      %s85 = sphi 0, %s82
      %s86 = sphi 0, %s85
      %s102 = sphi 0, %s86
      %s110 = sphi 0, %s112
      %s113 = sphi 0, %s110
      %s114 = sphi 0, %s113
      %s130 = sphi 0, %s114
      %s140 = sphi 0, %s142
      %s143 = sphi 0, %s140
      %s144 = sphi 0, %s143
      %s160 = sphi 0, %s144
    $region4: #{conv_spatial_strided.1} parent=1 // loop_header_branch
      %15 = sbr.rel (%p13) target = $region8
    $region5: #{conv_spatial_strided.1} parent=1 // loop_body
      %s17 = ssub.s32 %s12, 1
      %s18 = ssub.s32 %s12, 2
      %s31 = sadd.s32 1, %s22
      %p32 = scmp.ge.s32.totalorder %s31, 1
      %s33 = scalar_select %p32, 0, %s31
      %s34 = sadd.s32 1, %s21
      %s35 = scalar_select %p32, %s34, %s21
      %p36 = scmp.ge.s32.totalorder %s35, 1
      %s37 = scalar_select %p36, 0, %s35
      %s38 = sadd.s32 1, %s20
      %s39 = scalar_select %p36, %s38, %s20
      %p40 = scmp.ge.s32.totalorder %s39, 4
      %s41 = scalar_select %p40, 0, %s39
      %s42 = sadd.s32 1, %s19
      %s43 = scalar_select %p40, %s42, %s19
      %p44 = scmp.ge.s32.totalorder %s43, 1
      %s45 = scalar_select %p44, 0, %s43
      %s46 = ssub.s32 %s19, %s45
      %s47 = ssub.s32 %s20, %s41
      %s48 = sor.u32 %s46, %s47
      %s49 = ssub.s32 %s22, %s33
      %s50 = sor.u32 %s48, %s49
      %p51 = scmp.eq.s32.totalorder %s50, 0
      %s53 = sadd.s32 %s52, 1
      %s54 = scalar_select %p51, %s52, %s53
      %p57 = pneg %p51
      %p58 = scmp.eq.s32.totalorder %s12, 3
      %p59 = por %p57, %p58
      %p60 = scmp.ne.s32.totalorder %s52, %s55
      %p61 = scmp.eq.s32.totalorder %s12, 0
      %p62 = por %p60, %p61
      %p63 = scmp.ne.s32.totalorder %s52, %s55
      %p64 = scmp.eq.s32.totalorder %s17, 3
      %p65 = por %p63, %p64
      %p66 = scmp.ne.s32.totalorder %s55, %s56
      %p67 = scmp.eq.s32.totalorder %s17, 0
      %p68 = por %p66, %p67
      %p69 = scmp.ne.s32.totalorder %s55, %s56
      %p70 = scmp.eq.s32.totalorder %s18, 3
      %p71 = por %p69, %p70
      %p73 = scmp.ne.s32.totalorder %s56, %s72
      %p74 = scmp.eq.s32.totalorder %s18, 0
      %p75 = por %p73, %p74
      %s76 = ssub.s32 %s19, %s45
      %s77 = ssub.s32 %s22, %s33
      %s78 = sor.u32 %s76, %s77
      %s79 = ssub.s32 %s21, %s37
      %s80 = sor.u32 %s78, %s79
      %p81 = scmp.eq.s32.totalorder %s80, 0
      %s83 = sadd.s32 %s82, 1
      %s84 = scalar_select %p81, %s82, %s83
      %p87 = pneg %p81
      %p88 = scmp.eq.s32.totalorder %s12, 3
      %p89 = por %p87, %p88
      %p90 = scmp.ne.s32.totalorder %s82, %s85
      %p91 = scmp.eq.s32.totalorder %s12, 0
      %p92 = por %p90, %p91
      %p93 = scmp.ne.s32.totalorder %s82, %s85
      %p94 = scmp.eq.s32.totalorder %s17, 3
      %p95 = por %p93, %p94
      %p96 = scmp.ne.s32.totalorder %s85, %s86
      %p97 = scmp.eq.s32.totalorder %s17, 0
      %p98 = por %p96, %p97
      %p99 = scmp.ne.s32.totalorder %s85, %s86
      %p100 = scmp.eq.s32.totalorder %s18, 3
      %p101 = por %p99, %p100
      %p103 = scmp.ne.s32.totalorder %s86, %s102
      %p104 = scmp.eq.s32.totalorder %s18, 0
      %p105 = por %p103, %p104
      %s106 = ssub.s32 %s19, %s45
      %s107 = ssub.s32 %s21, %s37
      %s108 = sor.u32 %s106, %s107
      %p109 = scmp.eq.s32.totalorder %s108, 0
      %s111 = sadd.s32 %s110, 1
      %s112 = scalar_select %p109, %s110, %s111
      %p115 = pneg %p109
      %p116 = scmp.eq.s32.totalorder %s12, 3
      %p117 = por %p115, %p116
      %p118 = scmp.ne.s32.totalorder %s110, %s113
      %p119 = scmp.eq.s32.totalorder %s12, 0
      %p120 = por %p118, %p119
      %p121 = scmp.ne.s32.totalorder %s110, %s113
      %p122 = scmp.eq.s32.totalorder %s17, 3
      %p123 = por %p121, %p122
      %p124 = scmp.ne.s32.totalorder %s113, %s114
      %p125 = scmp.eq.s32.totalorder %s17, 0
      %p126 = por %p124, %p125
      %p127 = scmp.ne.s32.totalorder %s113, %s114
      %p128 = scmp.eq.s32.totalorder %s18, 3
      %p129 = por %p127, %p128
      %p131 = scmp.ne.s32.totalorder %s114, %s130
      %p132 = scmp.eq.s32.totalorder %s18, 0
      %p133 = por %p131, %p132
      %s134 = ssub.s32 %s19, %s45
      %s135 = ssub.s32 %s20, %s41
      %s136 = sor.u32 %s134, %s135
      %s137 = ssub.s32 %s21, %s37
      %s138 = sor.u32 %s136, %s137
      %p139 = scmp.eq.s32.totalorder %s138, 0
      %s141 = sadd.s32 %s140, 1
      %s142 = scalar_select %p139, %s140, %s141
      %p145 = pneg %p139
      %p146 = scmp.eq.s32.totalorder %s12, 3
      %p147 = por %p145, %p146
      %p148 = scmp.ne.s32.totalorder %s140, %s143
      %p149 = scmp.eq.s32.totalorder %s12, 0
      %p150 = por %p148, %p149
      %p151 = scmp.ne.s32.totalorder %s140, %s143
      %p152 = scmp.eq.s32.totalorder %s17, 3
      %p153 = por %p151, %p152
      %p154 = scmp.ne.s32.totalorder %s143, %s144
      %p155 = scmp.eq.s32.totalorder %s17, 0
      %p156 = por %p154, %p155
      %p157 = scmp.ne.s32.totalorder %s143, %s144
      %p158 = scmp.eq.s32.totalorder %s18, 3
      %p159 = por %p157, %p158
      %p161 = scmp.ne.s32.totalorder %s144, %s160
      %p162 = scmp.eq.s32.totalorder %s18, 0
      %p163 = por %p161, %p162
      %p164 = scmp.le.s32.totalorder 1, %s12
      %p165 = scmp.lt.s32.totalorder %s12, 5
      %p166 = pnand %p164, %p165
      %p167 = pneg %p166
      // Predicated region
      $region9: #{conv_spatial_strided.1} parent=5 // pred_check
        _
      $region10: #{conv_spatial_strided.1} parent=5 // pred_check_branch
        %169 = sbr.rel (%p166) target = $region12
      $region11: #{conv_spatial_strided.1} parent=5 // pred_region
        %s170 = ssub.s32 %s12, 1
        // Predicated region
        $region13: #{conv_spatial_strided.1} parent=11 // pred_check
          %p171 = pneg %p98
        $region14: #{conv_spatial_strided.1} parent=11 // pred_check_branch
          %173 = sbr.rel (%p171) target = $region16
        $region15: #{conv_spatial_strided.1} parent=11 // pred_region
          %s174 = smul.u32 19, %s26
          %p175 = scmp.lt.s32.totalorder %s23, 0
          %s176 = scalar_select %p175, %s23, 0
          %p177 = scmp.lt.s32.totalorder %s174, 18
          %s178 = scalar_select %p177, %s174, 18
          %p179 = scmp.lt.s32.totalorder %s25, 0
          %s180 = scalar_select %p179, %s25, 0
          %s181 = sadd.s32 %s180, %s178
          %s182 = smul.addr %s176, 19
          %s183 = sadd.s32 %s181, %s182
          %s184 = smul.addr %s183, 4
          %s185 = scalar_lea.vmem %s1, %s184
          %s186 = smul.u32 19, %s26
        $region16: #{conv_spatial_strided.1} parent=11 // pred_fallthru
          _
        // Predicated region
        $region17: #{conv_spatial_strided.1} parent=11 // pred_check
          %p187 = pneg %p126
        $region18: #{conv_spatial_strided.1} parent=11 // pred_check_branch
          %189 = sbr.rel (%p187) target = $region20
        $region19: #{conv_spatial_strided.1} parent=11 // pred_region
          %p190 = scmp.lt.s32.totalorder %s23, 0
          %s191 = scalar_select %p190, %s23, 0
          %p192 = scmp.lt.s32.totalorder %s25, 0
          %s193 = scalar_select %p192, %s25, 0
          %s194 = sadd.s32 %s193, %s191
          %s195 = scalar_lea.vmem %s2, %s194
        $region20: #{conv_spatial_strided.1} parent=11 // pred_fallthru
          _
      $region12: #{conv_spatial_strided.1} parent=5 // pred_fallthru
        _
      %p196 = scmp.lt.s32.totalorder %s12, 4
      // Predicated region
      $region21: #{conv_spatial_strided.1} parent=5 // pred_check
        %p197 = pneg %p196
      $region22: #{conv_spatial_strided.1} parent=5 // pred_check_branch
        %199 = sbr.rel (%p197) target = $region24
      $region23: #{conv_spatial_strided.1} parent=5 // pred_region
        // Predicated region
        $region25: #{conv_spatial_strided.1} parent=23 // pred_check
          %p200 = pneg %p62
        $region26: #{conv_spatial_strided.1} parent=23 // pred_check_branch
          %202 = sbr.rel (%p200) target = $region28
        $region27: #{conv_spatial_strided.1} parent=23 // pred_region
          %s203 = smul.u32 64, %s20
          %s204 = smul.u32 2, %s22
          %p205 = scmp.lt.s32.totalorder %s19, 0
          %s206 = scalar_select %p205, %s19, 0
          %p207 = scmp.lt.s32.totalorder %s203, 255
          %s208 = scalar_select %p207, %s203, 255
          %p209 = scmp.lt.s32.totalorder %s204, 1
          %s210 = scalar_select %p209, %s204, 1
          %s211 = smul.addr %s208, 2
          %s212 = sadd.s32 %s210, %s211
          %s213 = smul.addr %s206, 512
          %s214 = sadd.s32 %s212, %s213
          %s215 = smul.addr %s214, 4
          %s216 = scalar_lea.vmem %s0, %s215
          %s217 = smul.u32 64, %s20
          %s218 = smul.u32 2, %s22
        $region28: #{conv_spatial_strided.1} parent=23 // pred_fallthru
          _
      $region24: #{conv_spatial_strided.1} parent=5 // pred_fallthru
        _
      %p219 = scmp.le.s32.totalorder 1, %s12
      %p220 = scmp.lt.s32.totalorder %s12, 5
      %p221 = pnand %p219, %p220
      %p222 = pneg %p221
      // Predicated region
      $region29: #{conv_spatial_strided.1} parent=5 // pred_check
        _
      $region30: #{conv_spatial_strided.1} parent=5 // pred_check_branch
        %224 = sbr.rel (%p221) target = $region32
      $region31: #{conv_spatial_strided.1} parent=5 // pred_region
        %s225 = ssub.s32 %s12, 1
        %s226 = smul.u32 64, %s24
        %s227 = smul.u32 2, %s26
        %p228 = scmp.lt.s32.totalorder %s23, 0
        %s229 = scalar_select %p228, %s23, 0
        %p230 = scmp.lt.s32.totalorder %s226, 255
        %s231 = scalar_select %p230, %s226, 255
        %p232 = scmp.lt.s32.totalorder %s227, 1
        %s233 = scalar_select %p232, %s227, 1
        %s234 = smul.addr %s231, 2
        %s235 = sadd.s32 %s233, %s234
        %s236 = smul.addr %s229, 512
        %s237 = sadd.s32 %s235, %s236
        %s238 = smul.addr %s237, 4
        %s239 = scalar_lea.vmem %s0, %s238
        %p240 = pneg %p68
        %p241 = pneg %p65
        %s242 = smul.u32 19, %s26
        %p243 = scmp.lt.s32.totalorder %s23, 0
        %s244 = scalar_select %p243, %s23, 0
        %p245 = scmp.lt.s32.totalorder %s242, 18
        %s246 = scalar_select %p245, %s242, 18
        %p247 = scmp.lt.s32.totalorder %s25, 0
        %s248 = scalar_select %p247, %s25, 0
        %s249 = sadd.s32 %s248, %s246
        %s250 = smul.addr %s244, 19
        %s251 = sadd.s32 %s249, %s250
        %s252 = smul.addr %s251, 4
        %s253 = scalar_lea.vmem %s1, %s252
        %p254 = pneg %p98
        %p255 = pneg %p95
        %p256 = scmp.lt.s32.totalorder %s23, 0
        %s257 = scalar_select %p256, %s23, 0
        %p258 = scmp.lt.s32.totalorder %s25, 0
        %s259 = scalar_select %p258, %s25, 0
        %s260 = sadd.s32 %s259, %s257
        %s261 = scalar_lea.vmem %s2, %s260
        %p262 = pneg %p126
        %p263 = pneg %p123
        %p264 = pneg %p156
        %p265 = pneg %p153
        %s266 = sand.u32 %s143, 1
        %s267 = scalar_lea.sflag [#allocation4], %s266
        %s268 = sand.u32 %s143, 1
        %s269 = smul.addr %s268, 256
        %s270 = scalar_lea.vmem [#allocation3], %s269
        %s271 = smul.u32 64, %s24
        %s272 = smul.u32 2, %s26
        %p273 = scmp.lt.s32.totalorder %s23, 0
        %s274 = scalar_select %p273, %s23, 0
        %p275 = scmp.lt.s32.totalorder %s271, 255
        %s276 = scalar_select %p275, %s271, 255
        %p277 = scmp.lt.s32.totalorder %s272, 1
        %s278 = scalar_select %p277, %s272, 1
        %s279 = smul.addr %s276, 2
        %s280 = sadd.s32 %s278, %s279
        %s281 = smul.addr %s274, 512
        %s282 = sadd.s32 %s280, %s281
        %s283 = smul.addr %s282, 4
        %s284 = scalar_lea.vmem %s0, %s283
        %s285 = smul.u32 64, %s24
        %s286 = smul.u32 2, %s26
        %s287 = smul.u32 19, %s26
        %p288 = scmp.lt.s32.totalorder %s23, 0
        %s289 = scalar_select %p288, %s23, 0
        %p290 = scmp.lt.s32.totalorder %s287, 18
        %s291 = scalar_select %p290, %s287, 18
        %p292 = scmp.lt.s32.totalorder %s25, 0
        %s293 = scalar_select %p292, %s25, 0
        %s294 = sadd.s32 %s293, %s291
        %s295 = smul.addr %s289, 19
        %s296 = sadd.s32 %s294, %s295
        %s297 = smul.addr %s296, 4
        %s298 = scalar_lea.vmem %s1, %s297
        %s299 = smul.u32 19, %s26
        %p300 = scmp.lt.s32.totalorder %s23, 0
        %s301 = scalar_select %p300, %s23, 0
        %p302 = scmp.lt.s32.totalorder %s25, 0
        %s303 = scalar_select %p302, %s25, 0
        %s304 = sadd.s32 %s303, %s301
        %s305 = scalar_lea.vmem %s2, %s304
        %s306 = smul.u32 64, %s24
        %p308 = scmp.eq.s32.totalorder %s26, 0
        // Predicated region
        $region33: #{conv_spatial_strided.1} parent=31 // pred_check
          %p309 = pneg %p308
        $region34: #{conv_spatial_strided.1} parent=31 // pred_check_branch
          %311 = sbr.rel (%p309) target = $region36
        $region35: #{conv_spatial_strided.1} parent=31 // pred_region
          %vm312 = vcmask 523264
          %313 = vst.msk [vmem:[#allocation2] sm:$0xff] %vm312, 0.0
          %314 = vst.msk [vmem:[#allocation2 + $0x8] sm:$0xff] %vm312, 0.0
          %315 = vst.msk [vmem:[#allocation2 + $0x10] sm:$0xff] %vm312, 0.0
          %316 = vst.msk [vmem:[#allocation2 + $0x18] sm:$0xff] %vm312, 0.0
          %317 = vst.msk [vmem:[#allocation2 + $0x20] sm:$0xff] %vm312, 0.0
          %318 = vst.msk [vmem:[#allocation2 + $0x28] sm:$0xff] %vm312, 0.0
          %319 = vst.msk [vmem:[#allocation2 + $0x30] sm:$0xff] %vm312, 0.0
          %320 = vst.msk [vmem:[#allocation2 + $0x38] sm:$0xff] %vm312, 0.0
          %321 = vst.msk [vmem:[#allocation2 + $0x40] sm:$0xff] %vm312, 0.0
          %322 = vst.msk [vmem:[#allocation2 + $0x48] sm:$0xff] %vm312, 0.0
          %323 = vst.msk [vmem:[#allocation2 + $0x50] sm:$0xff] %vm312, 0.0
          %324 = vst.msk [vmem:[#allocation2 + $0x58] sm:$0xff] %vm312, 0.0
          %325 = vst.msk [vmem:[#allocation2 + $0x60] sm:$0xff] %vm312, 0.0
          %326 = vst.msk [vmem:[#allocation2 + $0x68] sm:$0xff] %vm312, 0.0
          %327 = vst.msk [vmem:[#allocation2 + $0x70] sm:$0xff] %vm312, 0.0
          %328 = vst.msk [vmem:[#allocation2 + $0x78] sm:$0xff] %vm312, 0.0
          %329 = vst.msk [vmem:[#allocation2 + $0x80] sm:$0xff] %vm312, 0.0
          %330 = vst.msk [vmem:[#allocation2 + $0x88] sm:$0xff] %vm312, 0.0
          %331 = vst.msk [vmem:[#allocation2 + $0x90] sm:$0xff] %vm312, 0.0
          %332 = vst.msk [vmem:[#allocation2 + $0x98] sm:$0xff] %vm312, 0.0
          %333 = vst.msk [vmem:[#allocation2 + $0xa0] sm:$0xff] %vm312, 0.0
          %334 = vst.msk [vmem:[#allocation2 + $0xa8] sm:$0xff] %vm312, 0.0
          %335 = vst.msk [vmem:[#allocation2 + $0xb0] sm:$0xff] %vm312, 0.0
          %336 = vst.msk [vmem:[#allocation2 + $0xb8] sm:$0xff] %vm312, 0.0
          %337 = vst.msk [vmem:[#allocation2 + $0xc0] sm:$0xff] %vm312, 0.0
          %338 = vst.msk [vmem:[#allocation2 + $0xc8] sm:$0xff] %vm312, 0.0
          %339 = vst.msk [vmem:[#allocation2 + $0xd0] sm:$0xff] %vm312, 0.0
          %340 = vst.msk [vmem:[#allocation2 + $0xd8] sm:$0xff] %vm312, 0.0
          %341 = vst.msk [vmem:[#allocation2 + $0xe0] sm:$0xff] %vm312, 0.0
          %342 = vst.msk [vmem:[#allocation2 + $0xe8] sm:$0xff] %vm312, 0.0
          %343 = vst.msk [vmem:[#allocation2 + $0xf0] sm:$0xff] %vm312, 0.0
          %344 = vst.msk [vmem:[#allocation2 + $0xf8] sm:$0xff] %vm312, 0.0
          %345 = vst.msk [vmem:[#allocation2 + $0x100] sm:$0xff] %vm312, 0.0
          %346 = vst.msk [vmem:[#allocation2 + $0x108] sm:$0xff] %vm312, 0.0
          %347 = vst.msk [vmem:[#allocation2 + $0x110] sm:$0xff] %vm312, 0.0
          %348 = vst.msk [vmem:[#allocation2 + $0x118] sm:$0xff] %vm312, 0.0
          %349 = vst.msk [vmem:[#allocation2 + $0x120] sm:$0xff] %vm312, 0.0
          %350 = vst.msk [vmem:[#allocation2 + $0x128] sm:$0xff] %vm312, 0.0
          %351 = vst.msk [vmem:[#allocation2 + $0x130] sm:$0xff] %vm312, 0.0
          %352 = vst.msk [vmem:[#allocation2 + $0x138] sm:$0xff] %vm312, 0.0
          %353 = vst.msk [vmem:[#allocation2 + $0x140] sm:$0xff] %vm312, 0.0
          %354 = vst.msk [vmem:[#allocation2 + $0x148] sm:$0xff] %vm312, 0.0
          %355 = vst.msk [vmem:[#allocation2 + $0x150] sm:$0xff] %vm312, 0.0
          %356 = vst.msk [vmem:[#allocation2 + $0x158] sm:$0xff] %vm312, 0.0
          %357 = vst.msk [vmem:[#allocation2 + $0x160] sm:$0xff] %vm312, 0.0
          %358 = vst.msk [vmem:[#allocation2 + $0x168] sm:$0xff] %vm312, 0.0
          %359 = vst.msk [vmem:[#allocation2 + $0x170] sm:$0xff] %vm312, 0.0
          %360 = vst.msk [vmem:[#allocation2 + $0x178] sm:$0xff] %vm312, 0.0
          %361 = vst.msk [vmem:[#allocation2 + $0x180] sm:$0xff] %vm312, 0.0
          %362 = vst.msk [vmem:[#allocation2 + $0x188] sm:$0xff] %vm312, 0.0
          %363 = vst.msk [vmem:[#allocation2 + $0x190] sm:$0xff] %vm312, 0.0
          %364 = vst.msk [vmem:[#allocation2 + $0x198] sm:$0xff] %vm312, 0.0
          %365 = vst.msk [vmem:[#allocation2 + $0x1a0] sm:$0xff] %vm312, 0.0
          %366 = vst.msk [vmem:[#allocation2 + $0x1a8] sm:$0xff] %vm312, 0.0
          %367 = vst.msk [vmem:[#allocation2 + $0x1b0] sm:$0xff] %vm312, 0.0
          %368 = vst.msk [vmem:[#allocation2 + $0x1b8] sm:$0xff] %vm312, 0.0
          %369 = vst.msk [vmem:[#allocation2 + $0x1c0] sm:$0xff] %vm312, 0.0
          %370 = vst.msk [vmem:[#allocation2 + $0x1c8] sm:$0xff] %vm312, 0.0
          %371 = vst.msk [vmem:[#allocation2 + $0x1d0] sm:$0xff] %vm312, 0.0
          %372 = vst.msk [vmem:[#allocation2 + $0x1d8] sm:$0xff] %vm312, 0.0
          %373 = vst.msk [vmem:[#allocation2 + $0x1e0] sm:$0xff] %vm312, 0.0
          %374 = vst.msk [vmem:[#allocation2 + $0x1e8] sm:$0xff] %vm312, 0.0
          %375 = vst.msk [vmem:[#allocation2 + $0x1f0] sm:$0xff] %vm312, 0.0
          %376 = vst.msk [vmem:[#allocation2 + $0x1f8] sm:$0xff] %vm312, 0.0
        $region36: #{conv_spatial_strided.1} parent=31 // pred_fallthru
          _
        %v377 = vld [vmem:[#allocation2] sm:$0xff]
        %v378 = vld [vmem:[#allocation2 + $0x8] sm:$0xff]
        %v379 = vld [vmem:[#allocation2 + $0x10] sm:$0xff]
        %v380 = vld [vmem:[#allocation2 + $0x18] sm:$0xff]
        %v381 = vld [vmem:[#allocation2 + $0x20] sm:$0xff]
        %v382 = vld [vmem:[#allocation2 + $0x28] sm:$0xff]
        %v383 = vld [vmem:[#allocation2 + $0x30] sm:$0xff]
        %v384 = vld [vmem:[#allocation2 + $0x38] sm:$0xff]
        %v385 = vld [vmem:[#allocation2 + $0x40] sm:$0xff]
        %v386 = vld [vmem:[#allocation2 + $0x48] sm:$0xff]
        %v387 = vld [vmem:[#allocation2 + $0x50] sm:$0xff]
        %v388 = vld [vmem:[#allocation2 + $0x58] sm:$0xff]
        %v389 = vld [vmem:[#allocation2 + $0x60] sm:$0xff]
        %v390 = vld [vmem:[#allocation2 + $0x68] sm:$0xff]
        %v391 = vld [vmem:[#allocation2 + $0x70] sm:$0xff]
        %v392 = vld [vmem:[#allocation2 + $0x78] sm:$0xff]
        %v393 = vld [vmem:[#allocation2 + $0x80] sm:$0xff]
        %v394 = vld [vmem:[#allocation2 + $0x88] sm:$0xff]
        %v395 = vld [vmem:[#allocation2 + $0x90] sm:$0xff]
        %v396 = vld [vmem:[#allocation2 + $0x98] sm:$0xff]
        %v397 = vld [vmem:[#allocation2 + $0xa0] sm:$0xff]
        %v398 = vld [vmem:[#allocation2 + $0xa8] sm:$0xff]
        %v399 = vld [vmem:[#allocation2 + $0xb0] sm:$0xff]
        %v400 = vld [vmem:[#allocation2 + $0xb8] sm:$0xff]
        %v401 = vld [vmem:[#allocation2 + $0xc0] sm:$0xff]
        %v402 = vld [vmem:[#allocation2 + $0xc8] sm:$0xff]
        %v403 = vld [vmem:[#allocation2 + $0xd0] sm:$0xff]
        %v404 = vld [vmem:[#allocation2 + $0xd8] sm:$0xff]
        %v405 = vld [vmem:[#allocation2 + $0xe0] sm:$0xff]
        %v406 = vld [vmem:[#allocation2 + $0xe8] sm:$0xff]
        %v407 = vld [vmem:[#allocation2 + $0xf0] sm:$0xff]
        %v408 = vld [vmem:[#allocation2 + $0xf8] sm:$0xff]
        %v409 = vld [vmem:[#allocation2 + $0x100] sm:$0xff]
        %v410 = vld [vmem:[#allocation2 + $0x108] sm:$0xff]
        %v411 = vld [vmem:[#allocation2 + $0x110] sm:$0xff]
        %v412 = vld [vmem:[#allocation2 + $0x118] sm:$0xff]
        %v413 = vld [vmem:[#allocation2 + $0x120] sm:$0xff]
        %v414 = vld [vmem:[#allocation2 + $0x128] sm:$0xff]
        %v415 = vld [vmem:[#allocation2 + $0x130] sm:$0xff]
        %v416 = vld [vmem:[#allocation2 + $0x138] sm:$0xff]
        %v417 = vld [vmem:[#allocation2 + $0x140] sm:$0xff]
        %v418 = vld [vmem:[#allocation2 + $0x148] sm:$0xff]
        %v419 = vld [vmem:[#allocation2 + $0x150] sm:$0xff]
        %v420 = vld [vmem:[#allocation2 + $0x158] sm:$0xff]
        %v421 = vld [vmem:[#allocation2 + $0x160] sm:$0xff]
        %v422 = vld [vmem:[#allocation2 + $0x168] sm:$0xff]
        %v423 = vld [vmem:[#allocation2 + $0x170] sm:$0xff]
        %v424 = vld [vmem:[#allocation2 + $0x178] sm:$0xff]
        %v425 = vld [vmem:[#allocation2 + $0x180] sm:$0xff]
        %v426 = vld [vmem:[#allocation2 + $0x188] sm:$0xff]
        %v427 = vld [vmem:[#allocation2 + $0x190] sm:$0xff]
        %v428 = vld [vmem:[#allocation2 + $0x198] sm:$0xff]
        %v429 = vld [vmem:[#allocation2 + $0x1a0] sm:$0xff]
        %v430 = vld [vmem:[#allocation2 + $0x1a8] sm:$0xff]
        %v431 = vld [vmem:[#allocation2 + $0x1b0] sm:$0xff]
        %v432 = vld [vmem:[#allocation2 + $0x1b8] sm:$0xff]
        %v433 = vld [vmem:[#allocation2 + $0x1c0] sm:$0xff]
        %v434 = vld [vmem:[#allocation2 + $0x1c8] sm:$0xff]
        %v435 = vld [vmem:[#allocation2 + $0x1d0] sm:$0xff]
        %v436 = vld [vmem:[#allocation2 + $0x1d8] sm:$0xff]
        %v437 = vld [vmem:[#allocation2 + $0x1e0] sm:$0xff]
        %v438 = vld [vmem:[#allocation2 + $0x1e8] sm:$0xff]
        %v439 = vld [vmem:[#allocation2 + $0x1f0] sm:$0xff]
        %v440 = vld [vmem:[#allocation2 + $0x1f8] sm:$0xff]
        %v441 = vld [vmem:[%s284] sm:$0xff]
        %v442 = vld [vmem:[%s284 + $0x8] sm:$0xff]
        %v443 = vld [vmem:[%s284 + $0x10] sm:$0xff]
        %v444 = vld [vmem:[%s284 + $0x18] sm:$0xff]
        %v445 = vld [vmem:[%s284 + $0x20] sm:$0xff]
        %v446 = vld [vmem:[%s284 + $0x28] sm:$0xff]
        %v447 = vld [vmem:[%s284 + $0x30] sm:$0xff]
        %v448 = vld [vmem:[%s284 + $0x38] sm:$0xff]
        %v449 = vld [vmem:[%s284 + $0x40] sm:$0xff]
        %v450 = vld [vmem:[%s284 + $0x48] sm:$0xff]
        %v451 = vld [vmem:[%s284 + $0x50] sm:$0xff]
        %v452 = vld [vmem:[%s284 + $0x58] sm:$0xff]
        %v453 = vld [vmem:[%s284 + $0x60] sm:$0xff]
        %v454 = vld [vmem:[%s284 + $0x68] sm:$0xff]
        %v455 = vld [vmem:[%s284 + $0x70] sm:$0xff]
        %v456 = vld [vmem:[%s284 + $0x78] sm:$0xff]
        %v457 = vld [vmem:[%s284 + $0x80] sm:$0xff]
        %v458 = vld [vmem:[%s284 + $0x88] sm:$0xff]
        %v459 = vld [vmem:[%s284 + $0x90] sm:$0xff]
        %v460 = vld [vmem:[%s284 + $0x98] sm:$0xff]
        %v461 = vld [vmem:[%s284 + $0xa0] sm:$0xff]
        %v462 = vld [vmem:[%s284 + $0xa8] sm:$0xff]
        %v463 = vld [vmem:[%s284 + $0xb0] sm:$0xff]
        %v464 = vld [vmem:[%s284 + $0xb8] sm:$0xff]
        %v465 = vld [vmem:[%s284 + $0xc0] sm:$0xff]
        %v466 = vld [vmem:[%s284 + $0xc8] sm:$0xff]
        %v467 = vld [vmem:[%s284 + $0xd0] sm:$0xff]
        %v468 = vld [vmem:[%s284 + $0xd8] sm:$0xff]
        %v469 = vld [vmem:[%s284 + $0xe0] sm:$0xff]
        %v470 = vld [vmem:[%s284 + $0xe8] sm:$0xff]
        %v471 = vld [vmem:[%s284 + $0xf0] sm:$0xff]
        %v472 = vld [vmem:[%s284 + $0xf8] sm:$0xff]
        %v473 = vld [vmem:[%s284 + $0x100] sm:$0xff]
        %v474 = vld [vmem:[%s284 + $0x108] sm:$0xff]
        %v475 = vld [vmem:[%s284 + $0x110] sm:$0xff]
        %v476 = vld [vmem:[%s284 + $0x118] sm:$0xff]
        %v477 = vld [vmem:[%s284 + $0x120] sm:$0xff]
        %v478 = vld [vmem:[%s284 + $0x128] sm:$0xff]
        %v479 = vld [vmem:[%s284 + $0x130] sm:$0xff]
        %v480 = vld [vmem:[%s284 + $0x138] sm:$0xff]
        %v481 = vld [vmem:[%s284 + $0x140] sm:$0xff]
        %v482 = vld [vmem:[%s284 + $0x148] sm:$0xff]
        %v483 = vld [vmem:[%s284 + $0x150] sm:$0xff]
        %v484 = vld [vmem:[%s284 + $0x158] sm:$0xff]
        %v485 = vld [vmem:[%s284 + $0x160] sm:$0xff]
        %v486 = vld [vmem:[%s284 + $0x168] sm:$0xff]
        %v487 = vld [vmem:[%s284 + $0x170] sm:$0xff]
        %v488 = vld [vmem:[%s284 + $0x178] sm:$0xff]
        %v489 = vld [vmem:[%s284 + $0x180] sm:$0xff]
        %v490 = vld [vmem:[%s284 + $0x188] sm:$0xff]
        %v491 = vld [vmem:[%s284 + $0x190] sm:$0xff]
        %v492 = vld [vmem:[%s284 + $0x198] sm:$0xff]
        %v493 = vld [vmem:[%s284 + $0x1a0] sm:$0xff]
        %v494 = vld [vmem:[%s284 + $0x1a8] sm:$0xff]
        %v495 = vld [vmem:[%s284 + $0x1b0] sm:$0xff]
        %v496 = vld [vmem:[%s284 + $0x1b8] sm:$0xff]
        %v497 = vld [vmem:[%s284 + $0x1c0] sm:$0xff]
        %v498 = vld [vmem:[%s284 + $0x1c8] sm:$0xff]
        %v499 = vld [vmem:[%s284 + $0x1d0] sm:$0xff]
        %v500 = vld [vmem:[%s284 + $0x1d8] sm:$0xff]
        %v501 = vld [vmem:[%s284 + $0x1e0] sm:$0xff]
        %v502 = vld [vmem:[%s284 + $0x1e8] sm:$0xff]
        %v503 = vld [vmem:[%s284 + $0x1f0] sm:$0xff]
        %v504 = vld [vmem:[%s284 + $0x1f8] sm:$0xff]
        %v505 = vld [vmem:[%s298] sm:$0xf]
        %v506 = vld [vmem:[%s298 + $0x4] sm:$0xf]
        %v507 = vld [vmem:[%s298 + $0x8] sm:$0xf]
        %v508 = vld [vmem:[%s298 + $0xc] sm:$0xf]
        %v509 = vld [vmem:[%s298 + $0x10] sm:$0xf]
        %v510 = vld [vmem:[%s298 + $0x14] sm:$0xf]
        %v511 = vld [vmem:[%s298 + $0x18] sm:$0xf]
        %v512 = vld [vmem:[%s298 + $0x1c] sm:$0xf]
        %v513 = vld [vmem:[%s298 + $0x20] sm:$0xf]
        %v514 = vld [vmem:[%s298 + $0x24] sm:$0xf]
        %v515 = vld [vmem:[%s298 + $0x28] sm:$0xf]
        %v516 = vld [vmem:[%s298 + $0x2c] sm:$0xf]
        %v517 = vld [vmem:[%s298 + $0x30] sm:$0xf]
        %v518 = vld [vmem:[%s298 + $0x34] sm:$0xf]
        %v519 = vld [vmem:[%s298 + $0x38] sm:$0xf]
        %v520 = vld [vmem:[%s298 + $0x3c] sm:$0xf]
        %v521 = vld [vmem:[%s298 + $0x40] sm:$0xf]
        %v522 = vld [vmem:[%s298 + $0x44] sm:$0xf]
        %v523 = vld [vmem:[%s298 + $0x48] sm:$0x3]
        %v588 = vunpack.c.l.b16 %v441
        %v589 = vunpack.c.h.b16 %v441
        %v590 = vunpack.c.l.b16 %v442
        %v591 = vunpack.c.h.b16 %v442
        %v592 = vunpack.c.l.b16 %v443
        %v593 = vunpack.c.h.b16 %v443
        %v594 = vunpack.c.l.b16 %v444
        %v595 = vunpack.c.h.b16 %v444
        %v596 = vunpack.c.l.b16 %v445
        %v597 = vunpack.c.h.b16 %v445
        %v598 = vunpack.c.l.b16 %v446
        %v599 = vunpack.c.h.b16 %v446
        %v600 = vunpack.c.l.b16 %v447
        %v601 = vunpack.c.h.b16 %v447
        %v602 = vunpack.c.l.b16 %v448
        %v603 = vunpack.c.h.b16 %v448
        %v604 = vunpack.c.l.b16 %v449
        %v605 = vunpack.c.h.b16 %v449
        %v606 = vunpack.c.l.b16 %v450
        %v607 = vunpack.c.h.b16 %v450
        %v608 = vunpack.c.l.b16 %v451
        %v609 = vunpack.c.h.b16 %v451
        %v610 = vunpack.c.l.b16 %v452
        %v611 = vunpack.c.h.b16 %v452
        %v612 = vunpack.c.l.b16 %v453
        %v613 = vunpack.c.h.b16 %v453
        %v614 = vunpack.c.l.b16 %v454
        %v615 = vunpack.c.h.b16 %v454
        %v616 = vunpack.c.l.b16 %v455
        %v617 = vunpack.c.h.b16 %v455
        %v618 = vunpack.c.l.b16 %v456
        %v619 = vunpack.c.h.b16 %v456
        %v620 = vunpack.c.l.b16 %v457
        %v621 = vunpack.c.h.b16 %v457
        %v622 = vunpack.c.l.b16 %v458
        %v623 = vunpack.c.h.b16 %v458
        %v624 = vunpack.c.l.b16 %v459
        %v625 = vunpack.c.h.b16 %v459
        %v626 = vunpack.c.l.b16 %v460
        %v627 = vunpack.c.h.b16 %v460
        %v628 = vunpack.c.l.b16 %v461
        %v629 = vunpack.c.h.b16 %v461
        %v630 = vunpack.c.l.b16 %v462
        %v631 = vunpack.c.h.b16 %v462
        %v632 = vunpack.c.l.b16 %v463
        %v633 = vunpack.c.h.b16 %v463
        %v634 = vunpack.c.l.b16 %v464
        %v635 = vunpack.c.h.b16 %v464
        %v636 = vunpack.c.l.b16 %v465
        %v637 = vunpack.c.h.b16 %v465
        %v638 = vunpack.c.l.b16 %v466
        %v639 = vunpack.c.h.b16 %v466
        %v640 = vunpack.c.l.b16 %v467
        %v641 = vunpack.c.h.b16 %v467
        %v642 = vunpack.c.l.b16 %v468
        %v643 = vunpack.c.h.b16 %v468
        %v644 = vunpack.c.l.b16 %v469
        %v645 = vunpack.c.h.b16 %v469
        %v646 = vunpack.c.l.b16 %v470
        %v647 = vunpack.c.h.b16 %v470
        %v648 = vunpack.c.l.b16 %v471
        %v649 = vunpack.c.h.b16 %v471
        %v650 = vunpack.c.l.b16 %v472
        %v651 = vunpack.c.h.b16 %v472
        %v652 = vunpack.c.l.b16 %v473
        %v653 = vunpack.c.h.b16 %v473
        %v654 = vunpack.c.l.b16 %v474
        %v655 = vunpack.c.h.b16 %v474
        %v656 = vunpack.c.l.b16 %v475
        %v657 = vunpack.c.h.b16 %v475
        %v658 = vunpack.c.l.b16 %v476
        %v659 = vunpack.c.h.b16 %v476
        %v660 = vunpack.c.l.b16 %v477
        %v661 = vunpack.c.h.b16 %v477
        %v662 = vunpack.c.l.b16 %v478
        %v663 = vunpack.c.h.b16 %v478
        %v664 = vunpack.c.l.b16 %v479
        %v665 = vunpack.c.h.b16 %v479
        %v666 = vunpack.c.l.b16 %v480
        %v667 = vunpack.c.h.b16 %v480
        %v668 = vunpack.c.l.b16 %v481
        %v669 = vunpack.c.h.b16 %v481
        %v670 = vunpack.c.l.b16 %v482
        %v671 = vunpack.c.h.b16 %v482
        %v672 = vunpack.c.l.b16 %v483
        %v673 = vunpack.c.h.b16 %v483
        %v674 = vunpack.c.l.b16 %v484
        %v675 = vunpack.c.h.b16 %v484
        %v676 = vunpack.c.l.b16 %v485
        %v677 = vunpack.c.h.b16 %v485
        %v678 = vunpack.c.l.b16 %v486
        %v679 = vunpack.c.h.b16 %v486
        %v680 = vunpack.c.l.b16 %v487
        %v681 = vunpack.c.h.b16 %v487
        %v682 = vunpack.c.l.b16 %v488
        %v683 = vunpack.c.h.b16 %v488
        %v684 = vunpack.c.l.b16 %v489
        %v685 = vunpack.c.h.b16 %v489
        %v686 = vunpack.c.l.b16 %v490
        %v687 = vunpack.c.h.b16 %v490
        %v688 = vunpack.c.l.b16 %v491
        %v689 = vunpack.c.h.b16 %v491
        %v690 = vunpack.c.l.b16 %v492
        %v691 = vunpack.c.h.b16 %v492
        %v692 = vunpack.c.l.b16 %v493
        %v693 = vunpack.c.h.b16 %v493
        %v694 = vunpack.c.l.b16 %v494
        %v695 = vunpack.c.h.b16 %v494
        %v696 = vunpack.c.l.b16 %v495
        %v697 = vunpack.c.h.b16 %v495
        %v698 = vunpack.c.l.b16 %v496
        %v699 = vunpack.c.h.b16 %v496
        %v700 = vunpack.c.l.b16 %v497
        %v701 = vunpack.c.h.b16 %v497
        %v702 = vunpack.c.l.b16 %v498
        %v703 = vunpack.c.h.b16 %v498
        %v704 = vunpack.c.l.b16 %v499
        %v705 = vunpack.c.h.b16 %v499
        %v706 = vunpack.c.l.b16 %v500
        %v707 = vunpack.c.h.b16 %v500
        %v708 = vunpack.c.l.b16 %v501
        %v709 = vunpack.c.h.b16 %v501
        %v710 = vunpack.c.l.b16 %v502
        %v711 = vunpack.c.h.b16 %v502
        %v712 = vunpack.c.l.b16 %v503
        %v713 = vunpack.c.h.b16 %v503
        %v714 = vunpack.c.l.b16 %v504
        %v715 = vunpack.c.h.b16 %v504
        %v716 = vpack.c.b16 %v590, %v588
        %v717 = vpack.c.b16 %v591, %v589
        %v718 = vpack.c.b16 %v594, %v592
        %v719 = vpack.c.b16 %v595, %v593
        %v720 = vpack.c.b16 %v598, %v596
        %v721 = vpack.c.b16 %v599, %v597
        %v722 = vpack.c.b16 %v602, %v600
        %v723 = vpack.c.b16 %v603, %v601
        %v724 = vpack.c.b16 %v606, %v604
        %v725 = vpack.c.b16 %v607, %v605
        %v726 = vpack.c.b16 %v610, %v608
        %v727 = vpack.c.b16 %v611, %v609
        %v728 = vpack.c.b16 %v614, %v612
        %v729 = vpack.c.b16 %v615, %v613
        %v730 = vpack.c.b16 %v618, %v616
        %v731 = vpack.c.b16 %v619, %v617
        %v732 = vpack.c.b16 %v622, %v620
        %v733 = vpack.c.b16 %v623, %v621
        %v734 = vpack.c.b16 %v626, %v624
        %v735 = vpack.c.b16 %v627, %v625
        %v736 = vpack.c.b16 %v630, %v628
        %v737 = vpack.c.b16 %v631, %v629
        %v738 = vpack.c.b16 %v634, %v632
        %v739 = vpack.c.b16 %v635, %v633
        %v740 = vpack.c.b16 %v638, %v636
        %v741 = vpack.c.b16 %v639, %v637
        %v742 = vpack.c.b16 %v642, %v640
        %v743 = vpack.c.b16 %v643, %v641
        %v744 = vpack.c.b16 %v646, %v644
        %v745 = vpack.c.b16 %v647, %v645
        %v746 = vpack.c.b16 %v650, %v648
        %v747 = vpack.c.b16 %v651, %v649
        %v748 = vpack.c.b16 %v654, %v652
        %v749 = vpack.c.b16 %v655, %v653
        %v750 = vpack.c.b16 %v658, %v656
        %v751 = vpack.c.b16 %v659, %v657
        %v752 = vpack.c.b16 %v662, %v660
        %v753 = vpack.c.b16 %v663, %v661
        %v754 = vpack.c.b16 %v666, %v664
        %v755 = vpack.c.b16 %v667, %v665
        %v756 = vpack.c.b16 %v670, %v668
        %v757 = vpack.c.b16 %v671, %v669
        %v758 = vpack.c.b16 %v674, %v672
        %v759 = vpack.c.b16 %v675, %v673
        %v760 = vpack.c.b16 %v678, %v676
        %v761 = vpack.c.b16 %v679, %v677
        %v762 = vpack.c.b16 %v682, %v680
        %v763 = vpack.c.b16 %v683, %v681
        %v764 = vpack.c.b16 %v686, %v684
        %v765 = vpack.c.b16 %v687, %v685
        %v766 = vpack.c.b16 %v690, %v688
        %v767 = vpack.c.b16 %v691, %v689
        %v768 = vpack.c.b16 %v694, %v692
        %v769 = vpack.c.b16 %v695, %v693
        %v770 = vpack.c.b16 %v698, %v696
        %v771 = vpack.c.b16 %v699, %v697
        %v772 = vpack.c.b16 %v702, %v700
        %v773 = vpack.c.b16 %v703, %v701
        %v774 = vpack.c.b16 %v706, %v704
        %v775 = vpack.c.b16 %v707, %v705
        %v776 = vpack.c.b16 %v710, %v708
        %v777 = vpack.c.b16 %v711, %v709
        %v778 = vpack.c.b16 %v714, %v712
        %v779 = vpack.c.b16 %v715, %v713
        %v831 = vunpack.c.l.b16 %v505
        %v832 = vunpack.c.l.b16 %v506
        %v833 = vunpack.c.l.b16 %v507
        %v834 = vunpack.c.l.b16 %v508
        %v835 = vunpack.c.l.b16 %v509
        %v836 = vunpack.c.l.b16 %v510
        %v837 = vunpack.c.l.b16 %v511
        %v838 = vunpack.c.l.b16 %v512
        %v839 = vunpack.c.l.b16 %v513
        %v840 = vunpack.c.l.b16 %v514
        %v841 = vunpack.c.l.b16 %v515
        %v842 = vunpack.c.l.b16 %v516
        %v843 = vunpack.c.l.b16 %v517
        %v844 = vunpack.c.l.b16 %v518
        %v845 = vunpack.c.l.b16 %v519
        %v846 = vunpack.c.l.b16 %v520
        %v847 = vunpack.c.l.b16 %v521
        %v848 = vunpack.c.l.b16 %v522
        %v849 = vunpack.c.l.b16 %v523
        %v850 = vpack.c.b16 %v832, %v831
        %v851 = vpack.c.b16 %v834, %v833
        %v852 = vpack.c.b16 %v836, %v835
        %v853 = vpack.c.b16 %v838, %v837
        %v854 = vpack.c.b16 %v840, %v839
        %v855 = vpack.c.b16 %v842, %v841
        %v856 = vpack.c.b16 %v844, %v843
        %v857 = vpack.c.b16 %v846, %v845
        %v858 = vpack.c.b16 %v848, %v847
        %v859 = vpack.c.b16 %v849, %v849
        %vm869 = vcmask 154624
        %v871 = vsel %vm869, %v717, 0
        %v874 = vsel %vm869, %v719, 0
        %v877 = vsel %vm869, %v721, 0
        %v880 = vsel %vm869, %v723, 0
        %v883 = vsel %vm869, %v725, 0
        %v886 = vsel %vm869, %v727, 0
        %v889 = vsel %vm869, %v729, 0
        %v892 = vsel %vm869, %v731, 0
        %v895 = vsel %vm869, %v733, 0
        %v898 = vsel %vm869, %v735, 0
        %v901 = vsel %vm869, %v737, 0
        %v904 = vsel %vm869, %v739, 0
        %v907 = vsel %vm869, %v741, 0
        %v910 = vsel %vm869, %v743, 0
        %v913 = vsel %vm869, %v745, 0
        %v916 = vsel %vm869, %v747, 0
        %v919 = vsel %vm869, %v749, 0
        %v922 = vsel %vm869, %v751, 0
        %v925 = vsel %vm869, %v753, 0
        %v928 = vsel %vm869, %v755, 0
        %v931 = vsel %vm869, %v757, 0
        %v934 = vsel %vm869, %v759, 0
        %v937 = vsel %vm869, %v761, 0
        %v940 = vsel %vm869, %v763, 0
        %v943 = vsel %vm869, %v765, 0
        %v946 = vsel %vm869, %v767, 0
        %v949 = vsel %vm869, %v769, 0
        %v952 = vsel %vm869, %v771, 0
        %v955 = vsel %vm869, %v773, 0
        %v958 = vsel %vm869, %v775, 0
        %v961 = vsel %vm869, %v777, 0
        %v964 = vsel %vm869, %v779, 0
        %vm966 = vcmask 1040384
        %vm967 = vcmask 1041408
        %v968 = vsel %vm966, 4294967295, 65535
        %v969 = vsel %vm967, %v968, 0
        %v971 = vand.u32 %v859, %v969
        %973 = vmatpush.bf16.msra.mxu0 %v857
        %974 = vmatpush.bf16.msra.mxu0 %v856
        %975 = vmatpush.bf16.msra.mxu0 %v855
        %976 = vmatpush.bf16.msra.mxu0 %v854
        %977 = vmatpush.bf16.msra.mxu0 %v853
        %978 = vmatpush.bf16.msra.mxu0 %v852
        %979 = vmatpush.bf16.msra.mxu0 %v851
        %980 = vmatpush.bf16.msra.mxu0 %v850
        %981 = vmatmul.bf16.gmra.mxu0 %v716
        %v982 = vpop.f32.mrf.mxu0
        %v983 = vadd.f32 0.0, %v982
        %v984 = vpop.f32.mrf.mxu0
        %v985 = vadd.f32 0.0, %v984
        %986 = vmatmul.bf16.gmra.mxu0 %v718
        %v987 = vpop.f32.mrf.mxu0
        %v988 = vadd.f32 0.0, %v987
        %v989 = vpop.f32.mrf.mxu0
        %v990 = vadd.f32 0.0, %v989
        %991 = vmatmul.bf16.gmra.mxu0 %v720
        %v992 = vpop.f32.mrf.mxu0
        %v993 = vadd.f32 0.0, %v992
        %v994 = vpop.f32.mrf.mxu0
        %v995 = vadd.f32 0.0, %v994
        %996 = vmatmul.bf16.gmra.mxu0 %v722
        %v997 = vpop.f32.mrf.mxu0
        %v998 = vadd.f32 0.0, %v997
        %v999 = vpop.f32.mrf.mxu0
        %v1000 = vadd.f32 0.0, %v999
        %1001 = vmatmul.bf16.gmra.mxu0 %v724
        %v1002 = vpop.f32.mrf.mxu0
        %v1003 = vadd.f32 0.0, %v1002
        %v1004 = vpop.f32.mrf.mxu0
        %v1005 = vadd.f32 0.0, %v1004
        %1006 = vmatmul.bf16.gmra.mxu0 %v726
        %v1007 = vpop.f32.mrf.mxu0
        %v1008 = vadd.f32 0.0, %v1007
        %v1009 = vpop.f32.mrf.mxu0
        %v1010 = vadd.f32 0.0, %v1009
        %1011 = vmatmul.bf16.gmra.mxu0 %v728
        %v1012 = vpop.f32.mrf.mxu0
        %v1013 = vadd.f32 0.0, %v1012
        %v1014 = vpop.f32.mrf.mxu0
        %v1015 = vadd.f32 0.0, %v1014
        %1016 = vmatmul.bf16.gmra.mxu0 %v730
        %v1017 = vpop.f32.mrf.mxu0
        %v1018 = vadd.f32 0.0, %v1017
        %v1019 = vpop.f32.mrf.mxu0
        %v1020 = vadd.f32 0.0, %v1019
        %1021 = vmatmul.bf16.gmra.mxu0 %v732
        %v1022 = vpop.f32.mrf.mxu0
        %v1023 = vadd.f32 0.0, %v1022
        %v1024 = vpop.f32.mrf.mxu0
        %v1025 = vadd.f32 0.0, %v1024
        %1026 = vmatmul.bf16.gmra.mxu0 %v734
        %v1027 = vpop.f32.mrf.mxu0
        %v1028 = vadd.f32 0.0, %v1027
        %v1029 = vpop.f32.mrf.mxu0
        %v1030 = vadd.f32 0.0, %v1029
        %1031 = vmatmul.bf16.gmra.mxu0 %v736
        %v1032 = vpop.f32.mrf.mxu0
        %v1033 = vadd.f32 0.0, %v1032
        %v1034 = vpop.f32.mrf.mxu0
        %v1035 = vadd.f32 0.0, %v1034
        %1036 = vmatmul.bf16.gmra.mxu0 %v738
        %v1037 = vpop.f32.mrf.mxu0
        %v1038 = vadd.f32 0.0, %v1037
        %v1039 = vpop.f32.mrf.mxu0
        %v1040 = vadd.f32 0.0, %v1039
        %1041 = vmatmul.bf16.gmra.mxu0 %v740
        %v1042 = vpop.f32.mrf.mxu0
        %v1043 = vadd.f32 0.0, %v1042
        %v1044 = vpop.f32.mrf.mxu0
        %v1045 = vadd.f32 0.0, %v1044
        %1046 = vmatmul.bf16.gmra.mxu0 %v742
        %v1047 = vpop.f32.mrf.mxu0
        %v1048 = vadd.f32 0.0, %v1047
        %v1049 = vpop.f32.mrf.mxu0
        %v1050 = vadd.f32 0.0, %v1049
        %1051 = vmatmul.bf16.gmra.mxu0 %v744
        %v1052 = vpop.f32.mrf.mxu0
        %v1053 = vadd.f32 0.0, %v1052
        %v1054 = vpop.f32.mrf.mxu0
        %v1055 = vadd.f32 0.0, %v1054
        %1056 = vmatmul.bf16.gmra.mxu0 %v746
        %v1057 = vpop.f32.mrf.mxu0
        %v1058 = vadd.f32 0.0, %v1057
        %v1059 = vpop.f32.mrf.mxu0
        %v1060 = vadd.f32 0.0, %v1059
        %1061 = vmatmul.bf16.gmra.mxu0 %v748
        %v1062 = vpop.f32.mrf.mxu0
        %v1063 = vadd.f32 0.0, %v1062
        %v1064 = vpop.f32.mrf.mxu0
        %v1065 = vadd.f32 0.0, %v1064
        %1066 = vmatmul.bf16.gmra.mxu0 %v750
        %v1067 = vpop.f32.mrf.mxu0
        %v1068 = vadd.f32 0.0, %v1067
        %v1069 = vpop.f32.mrf.mxu0
        %v1070 = vadd.f32 0.0, %v1069
        %1071 = vmatmul.bf16.gmra.mxu0 %v752
        %v1072 = vpop.f32.mrf.mxu0
        %v1073 = vadd.f32 0.0, %v1072
        %v1074 = vpop.f32.mrf.mxu0
        %v1075 = vadd.f32 0.0, %v1074
        %1076 = vmatmul.bf16.gmra.mxu0 %v754
        %v1077 = vpop.f32.mrf.mxu0
        %v1078 = vadd.f32 0.0, %v1077
        %v1079 = vpop.f32.mrf.mxu0
        %v1080 = vadd.f32 0.0, %v1079
        %1081 = vmatmul.bf16.gmra.mxu0 %v756
        %v1082 = vpop.f32.mrf.mxu0
        %v1083 = vadd.f32 0.0, %v1082
        %v1084 = vpop.f32.mrf.mxu0
        %v1085 = vadd.f32 0.0, %v1084
        %1086 = vmatmul.bf16.gmra.mxu0 %v758
        %v1087 = vpop.f32.mrf.mxu0
        %v1088 = vadd.f32 0.0, %v1087
        %v1089 = vpop.f32.mrf.mxu0
        %v1090 = vadd.f32 0.0, %v1089
        %1091 = vmatmul.bf16.gmra.mxu0 %v760
        %v1092 = vpop.f32.mrf.mxu0
        %v1093 = vadd.f32 0.0, %v1092
        %v1094 = vpop.f32.mrf.mxu0
        %v1095 = vadd.f32 0.0, %v1094
        %1096 = vmatmul.bf16.gmra.mxu0 %v762
        %v1097 = vpop.f32.mrf.mxu0
        %v1098 = vadd.f32 0.0, %v1097
        %v1099 = vpop.f32.mrf.mxu0
        %v1100 = vadd.f32 0.0, %v1099
        %1101 = vmatmul.bf16.gmra.mxu0 %v764
        %v1102 = vpop.f32.mrf.mxu0
        %v1103 = vadd.f32 0.0, %v1102
        %v1104 = vpop.f32.mrf.mxu0
        %v1105 = vadd.f32 0.0, %v1104
        %1106 = vmatmul.bf16.gmra.mxu0 %v766
        %v1107 = vpop.f32.mrf.mxu0
        %v1108 = vadd.f32 0.0, %v1107
        %v1109 = vpop.f32.mrf.mxu0
        %v1110 = vadd.f32 0.0, %v1109
        %1111 = vmatmul.bf16.gmra.mxu0 %v768
        %v1112 = vpop.f32.mrf.mxu0
        %v1113 = vadd.f32 0.0, %v1112
        %v1114 = vpop.f32.mrf.mxu0
        %v1115 = vadd.f32 0.0, %v1114
        %1116 = vmatmul.bf16.gmra.mxu0 %v770
        %v1117 = vpop.f32.mrf.mxu0
        %v1118 = vadd.f32 0.0, %v1117
        %v1119 = vpop.f32.mrf.mxu0
        %v1120 = vadd.f32 0.0, %v1119
        %1121 = vmatmul.bf16.gmra.mxu0 %v772
        %v1122 = vpop.f32.mrf.mxu0
        %v1123 = vadd.f32 0.0, %v1122
        %v1124 = vpop.f32.mrf.mxu0
        %v1125 = vadd.f32 0.0, %v1124
        %1126 = vmatmul.bf16.gmra.mxu0 %v774
        %v1127 = vpop.f32.mrf.mxu0
        %v1128 = vadd.f32 0.0, %v1127
        %v1129 = vpop.f32.mrf.mxu0
        %v1130 = vadd.f32 0.0, %v1129
        %1131 = vmatmul.bf16.gmra.mxu0 %v776
        %v1132 = vpop.f32.mrf.mxu0
        %v1133 = vadd.f32 0.0, %v1132
        %v1134 = vpop.f32.mrf.mxu0
        %v1135 = vadd.f32 0.0, %v1134
        %1136 = vmatmul.bf16.gmra.mxu0 %v778
        %v1137 = vpop.f32.mrf.mxu0
        %v1138 = vadd.f32 0.0, %v1137
        %v1139 = vpop.f32.mrf.mxu0
        %v1140 = vadd.f32 0.0, %v1139
        %1141 = vdwg.mxu0
        %1142 = vmatpush.bf16.msra.mxu0 0
        %1143 = vmatpush.bf16.msra.mxu0 0
        %1144 = vmatpush.bf16.msra.mxu0 0
        %1145 = vmatpush.bf16.msra.mxu0 0
        %1146 = vmatpush.bf16.msra.mxu0 0
        %1147 = vmatpush.bf16.msra.mxu0 0
        %1148 = vmatpush.bf16.msra.mxu0 %v971
        %1149 = vmatpush.bf16.msra.mxu0 %v858
        %1150 = vmatmul.bf16.gmra.mxu0 %v871
        %v1151 = vpop.f32.mrf.mxu0
        %v1152 = vadd.f32 %v983, %v1151
        %v1153 = vpop.f32.mrf.mxu0
        %v1154 = vadd.f32 %v985, %v1153
        %1155 = vmatmul.bf16.gmra.mxu0 %v874
        %v1156 = vpop.f32.mrf.mxu0
        %v1157 = vadd.f32 %v988, %v1156
        %v1158 = vpop.f32.mrf.mxu0
        %v1159 = vadd.f32 %v990, %v1158
        %1160 = vmatmul.bf16.gmra.mxu0 %v877
        %v1161 = vpop.f32.mrf.mxu0
        %v1162 = vadd.f32 %v993, %v1161
        %v1163 = vpop.f32.mrf.mxu0
        %v1164 = vadd.f32 %v995, %v1163
        %1165 = vmatmul.bf16.gmra.mxu0 %v880
        %v1166 = vpop.f32.mrf.mxu0
        %v1167 = vadd.f32 %v998, %v1166
        %v1168 = vpop.f32.mrf.mxu0
        %v1169 = vadd.f32 %v1000, %v1168
        %1170 = vmatmul.bf16.gmra.mxu0 %v883
        %v1171 = vpop.f32.mrf.mxu0
        %v1172 = vadd.f32 %v1003, %v1171
        %v1173 = vpop.f32.mrf.mxu0
        %v1174 = vadd.f32 %v1005, %v1173
        %1175 = vmatmul.bf16.gmra.mxu0 %v886
        %v1176 = vpop.f32.mrf.mxu0
        %v1177 = vadd.f32 %v1008, %v1176
        %v1178 = vpop.f32.mrf.mxu0
        %v1179 = vadd.f32 %v1010, %v1178
        %1180 = vmatmul.bf16.gmra.mxu0 %v889
        %v1181 = vpop.f32.mrf.mxu0
        %v1182 = vadd.f32 %v1013, %v1181
        %v1183 = vpop.f32.mrf.mxu0
        %v1184 = vadd.f32 %v1015, %v1183
        %1185 = vmatmul.bf16.gmra.mxu0 %v892
        %v1186 = vpop.f32.mrf.mxu0
        %v1187 = vadd.f32 %v1018, %v1186
        %v1188 = vpop.f32.mrf.mxu0
        %v1189 = vadd.f32 %v1020, %v1188
        %1190 = vmatmul.bf16.gmra.mxu0 %v895
        %v1191 = vpop.f32.mrf.mxu0
        %v1192 = vadd.f32 %v1023, %v1191
        %v1193 = vpop.f32.mrf.mxu0
        %v1194 = vadd.f32 %v1025, %v1193
        %1195 = vmatmul.bf16.gmra.mxu0 %v898
        %v1196 = vpop.f32.mrf.mxu0
        %v1197 = vadd.f32 %v1028, %v1196
        %v1198 = vpop.f32.mrf.mxu0
        %v1199 = vadd.f32 %v1030, %v1198
        %1200 = vmatmul.bf16.gmra.mxu0 %v901
        %v1201 = vpop.f32.mrf.mxu0
        %v1202 = vadd.f32 %v1033, %v1201
        %v1203 = vpop.f32.mrf.mxu0
        %v1204 = vadd.f32 %v1035, %v1203
        %1205 = vmatmul.bf16.gmra.mxu0 %v904
        %v1206 = vpop.f32.mrf.mxu0
        %v1207 = vadd.f32 %v1038, %v1206
        %v1208 = vpop.f32.mrf.mxu0
        %v1209 = vadd.f32 %v1040, %v1208
        %1210 = vmatmul.bf16.gmra.mxu0 %v907
        %v1211 = vpop.f32.mrf.mxu0
        %v1212 = vadd.f32 %v1043, %v1211
        %v1213 = vpop.f32.mrf.mxu0
        %v1214 = vadd.f32 %v1045, %v1213
        %1215 = vmatmul.bf16.gmra.mxu0 %v910
        %v1216 = vpop.f32.mrf.mxu0
        %v1217 = vadd.f32 %v1048, %v1216
        %v1218 = vpop.f32.mrf.mxu0
        %v1219 = vadd.f32 %v1050, %v1218
        %1220 = vmatmul.bf16.gmra.mxu0 %v913
        %v1221 = vpop.f32.mrf.mxu0
        %v1222 = vadd.f32 %v1053, %v1221
        %v1223 = vpop.f32.mrf.mxu0
        %v1224 = vadd.f32 %v1055, %v1223
        %1225 = vmatmul.bf16.gmra.mxu0 %v916
        %v1226 = vpop.f32.mrf.mxu0
        %v1227 = vadd.f32 %v1058, %v1226
        %v1228 = vpop.f32.mrf.mxu0
        %v1229 = vadd.f32 %v1060, %v1228
        %1230 = vmatmul.bf16.gmra.mxu0 %v919
        %v1231 = vpop.f32.mrf.mxu0
        %v1232 = vadd.f32 %v1063, %v1231
        %v1233 = vpop.f32.mrf.mxu0
        %v1234 = vadd.f32 %v1065, %v1233
        %1235 = vmatmul.bf16.gmra.mxu0 %v922
        %v1236 = vpop.f32.mrf.mxu0
        %v1237 = vadd.f32 %v1068, %v1236
        %v1238 = vpop.f32.mrf.mxu0
        %v1239 = vadd.f32 %v1070, %v1238
        %1240 = vmatmul.bf16.gmra.mxu0 %v925
        %v1241 = vpop.f32.mrf.mxu0
        %v1242 = vadd.f32 %v1073, %v1241
        %v1243 = vpop.f32.mrf.mxu0
        %v1244 = vadd.f32 %v1075, %v1243
        %1245 = vmatmul.bf16.gmra.mxu0 %v928
        %v1246 = vpop.f32.mrf.mxu0
        %v1247 = vadd.f32 %v1078, %v1246
        %v1248 = vpop.f32.mrf.mxu0
        %v1249 = vadd.f32 %v1080, %v1248
        %1250 = vmatmul.bf16.gmra.mxu0 %v931
        %v1251 = vpop.f32.mrf.mxu0
        %v1252 = vadd.f32 %v1083, %v1251
        %v1253 = vpop.f32.mrf.mxu0
        %v1254 = vadd.f32 %v1085, %v1253
        %1255 = vmatmul.bf16.gmra.mxu0 %v934
        %v1256 = vpop.f32.mrf.mxu0
        %v1257 = vadd.f32 %v1088, %v1256
        %v1258 = vpop.f32.mrf.mxu0
        %v1259 = vadd.f32 %v1090, %v1258
        %1260 = vmatmul.bf16.gmra.mxu0 %v937
        %v1261 = vpop.f32.mrf.mxu0
        %v1262 = vadd.f32 %v1093, %v1261
        %v1263 = vpop.f32.mrf.mxu0
        %v1264 = vadd.f32 %v1095, %v1263
        %1265 = vmatmul.bf16.gmra.mxu0 %v940
        %v1266 = vpop.f32.mrf.mxu0
        %v1267 = vadd.f32 %v1098, %v1266
        %v1268 = vpop.f32.mrf.mxu0
        %v1269 = vadd.f32 %v1100, %v1268
        %1270 = vmatmul.bf16.gmra.mxu0 %v943
        %v1271 = vpop.f32.mrf.mxu0
        %v1272 = vadd.f32 %v1103, %v1271
        %v1273 = vpop.f32.mrf.mxu0
        %v1274 = vadd.f32 %v1105, %v1273
        %1275 = vmatmul.bf16.gmra.mxu0 %v946
        %v1276 = vpop.f32.mrf.mxu0
        %v1277 = vadd.f32 %v1108, %v1276
        %v1278 = vpop.f32.mrf.mxu0
        %v1279 = vadd.f32 %v1110, %v1278
        %1280 = vmatmul.bf16.gmra.mxu0 %v949
        %v1281 = vpop.f32.mrf.mxu0
        %v1282 = vadd.f32 %v1113, %v1281
        %v1283 = vpop.f32.mrf.mxu0
        %v1284 = vadd.f32 %v1115, %v1283
        %1285 = vmatmul.bf16.gmra.mxu0 %v952
        %v1286 = vpop.f32.mrf.mxu0
        %v1287 = vadd.f32 %v1118, %v1286
        %v1288 = vpop.f32.mrf.mxu0
        %v1289 = vadd.f32 %v1120, %v1288
        %1290 = vmatmul.bf16.gmra.mxu0 %v955
        %v1291 = vpop.f32.mrf.mxu0
        %v1292 = vadd.f32 %v1123, %v1291
        %v1293 = vpop.f32.mrf.mxu0
        %v1294 = vadd.f32 %v1125, %v1293
        %1295 = vmatmul.bf16.gmra.mxu0 %v958
        %v1296 = vpop.f32.mrf.mxu0
        %v1297 = vadd.f32 %v1128, %v1296
        %v1298 = vpop.f32.mrf.mxu0
        %v1299 = vadd.f32 %v1130, %v1298
        %1300 = vmatmul.bf16.gmra.mxu0 %v961
        %v1301 = vpop.f32.mrf.mxu0
        %v1302 = vadd.f32 %v1133, %v1301
        %v1303 = vpop.f32.mrf.mxu0
        %v1304 = vadd.f32 %v1135, %v1303
        %1305 = vmatmul.bf16.gmra.mxu0 %v964
        %v1306 = vpop.f32.mrf.mxu0
        %v1307 = vadd.f32 %v1138, %v1306
        %v1308 = vpop.f32.mrf.mxu0
        %v1309 = vadd.f32 %v1140, %v1308
        %1310 = vdwg.mxu0
        %v1311 = vadd.f32 %v377, %v1152
        %v1312 = vadd.f32 %v378, %v1154
        %v1313 = vadd.f32 %v379, %v1157
        %v1314 = vadd.f32 %v380, %v1159
        %v1315 = vadd.f32 %v381, %v1162
        %v1316 = vadd.f32 %v382, %v1164
        %v1317 = vadd.f32 %v383, %v1167
        %v1318 = vadd.f32 %v384, %v1169
        %v1319 = vadd.f32 %v385, %v1172
        %v1320 = vadd.f32 %v386, %v1174
        %v1321 = vadd.f32 %v387, %v1177
        %v1322 = vadd.f32 %v388, %v1179
        %v1323 = vadd.f32 %v389, %v1182
        %v1324 = vadd.f32 %v390, %v1184
        %v1325 = vadd.f32 %v391, %v1187
        %v1326 = vadd.f32 %v392, %v1189
        %v1327 = vadd.f32 %v393, %v1192
        %v1328 = vadd.f32 %v394, %v1194
        %v1329 = vadd.f32 %v395, %v1197
        %v1330 = vadd.f32 %v396, %v1199
        %v1331 = vadd.f32 %v397, %v1202
        %v1332 = vadd.f32 %v398, %v1204
        %v1333 = vadd.f32 %v399, %v1207
        %v1334 = vadd.f32 %v400, %v1209
        %v1335 = vadd.f32 %v401, %v1212
        %v1336 = vadd.f32 %v402, %v1214
        %v1337 = vadd.f32 %v403, %v1217
        %v1338 = vadd.f32 %v404, %v1219
        %v1339 = vadd.f32 %v405, %v1222
        %v1340 = vadd.f32 %v406, %v1224
        %v1341 = vadd.f32 %v407, %v1227
        %v1342 = vadd.f32 %v408, %v1229
        %v1343 = vadd.f32 %v409, %v1232
        %v1344 = vadd.f32 %v410, %v1234
        %v1345 = vadd.f32 %v411, %v1237
        %v1346 = vadd.f32 %v412, %v1239
        %v1347 = vadd.f32 %v413, %v1242
        %v1348 = vadd.f32 %v414, %v1244
        %v1349 = vadd.f32 %v415, %v1247
        %v1350 = vadd.f32 %v416, %v1249
        %v1351 = vadd.f32 %v417, %v1252
        %v1352 = vadd.f32 %v418, %v1254
        %v1353 = vadd.f32 %v419, %v1257
        %v1354 = vadd.f32 %v420, %v1259
        %v1355 = vadd.f32 %v421, %v1262
        %v1356 = vadd.f32 %v422, %v1264
        %v1357 = vadd.f32 %v423, %v1267
        %v1358 = vadd.f32 %v424, %v1269
        %v1359 = vadd.f32 %v425, %v1272
        %v1360 = vadd.f32 %v426, %v1274
        %v1361 = vadd.f32 %v427, %v1277
        %v1362 = vadd.f32 %v428, %v1279
        %v1363 = vadd.f32 %v429, %v1282
        %v1364 = vadd.f32 %v430, %v1284
        %v1365 = vadd.f32 %v431, %v1287
        %v1366 = vadd.f32 %v432, %v1289
        %v1367 = vadd.f32 %v433, %v1292
        %v1368 = vadd.f32 %v434, %v1294
        %v1369 = vadd.f32 %v435, %v1297
        %v1370 = vadd.f32 %v436, %v1299
        %v1371 = vadd.f32 %v437, %v1302
        %v1372 = vadd.f32 %v438, %v1304
        %v1373 = vadd.f32 %v439, %v1307
        %v1374 = vadd.f32 %v440, %v1309
        %vm1375 = vcmask 523264
        %1376 = vst.msk [vmem:[#allocation2] sm:$0xff] %vm1375, %v1311
        %1377 = vst.msk [vmem:[#allocation2 + $0x8] sm:$0xff] %vm1375, %v1312
        %1378 = vst.msk [vmem:[#allocation2 + $0x10] sm:$0xff] %vm1375, %v1313
        %1379 = vst.msk [vmem:[#allocation2 + $0x18] sm:$0xff] %vm1375, %v1314
        %1380 = vst.msk [vmem:[#allocation2 + $0x20] sm:$0xff] %vm1375, %v1315
        %1381 = vst.msk [vmem:[#allocation2 + $0x28] sm:$0xff] %vm1375, %v1316
        %1382 = vst.msk [vmem:[#allocation2 + $0x30] sm:$0xff] %vm1375, %v1317
        %1383 = vst.msk [vmem:[#allocation2 + $0x38] sm:$0xff] %vm1375, %v1318
        %1384 = vst.msk [vmem:[#allocation2 + $0x40] sm:$0xff] %vm1375, %v1319
        %1385 = vst.msk [vmem:[#allocation2 + $0x48] sm:$0xff] %vm1375, %v1320
        %1386 = vst.msk [vmem:[#allocation2 + $0x50] sm:$0xff] %vm1375, %v1321
        %1387 = vst.msk [vmem:[#allocation2 + $0x58] sm:$0xff] %vm1375, %v1322
        %1388 = vst.msk [vmem:[#allocation2 + $0x60] sm:$0xff] %vm1375, %v1323
        %1389 = vst.msk [vmem:[#allocation2 + $0x68] sm:$0xff] %vm1375, %v1324
        %1390 = vst.msk [vmem:[#allocation2 + $0x70] sm:$0xff] %vm1375, %v1325
        %1391 = vst.msk [vmem:[#allocation2 + $0x78] sm:$0xff] %vm1375, %v1326
        %1392 = vst.msk [vmem:[#allocation2 + $0x80] sm:$0xff] %vm1375, %v1327
        %1393 = vst.msk [vmem:[#allocation2 + $0x88] sm:$0xff] %vm1375, %v1328
        %1394 = vst.msk [vmem:[#allocation2 + $0x90] sm:$0xff] %vm1375, %v1329
        %1395 = vst.msk [vmem:[#allocation2 + $0x98] sm:$0xff] %vm1375, %v1330
        %1396 = vst.msk [vmem:[#allocation2 + $0xa0] sm:$0xff] %vm1375, %v1331
        %1397 = vst.msk [vmem:[#allocation2 + $0xa8] sm:$0xff] %vm1375, %v1332
        %1398 = vst.msk [vmem:[#allocation2 + $0xb0] sm:$0xff] %vm1375, %v1333
        %1399 = vst.msk [vmem:[#allocation2 + $0xb8] sm:$0xff] %vm1375, %v1334
        %1400 = vst.msk [vmem:[#allocation2 + $0xc0] sm:$0xff] %vm1375, %v1335
        %1401 = vst.msk [vmem:[#allocation2 + $0xc8] sm:$0xff] %vm1375, %v1336
        %1402 = vst.msk [vmem:[#allocation2 + $0xd0] sm:$0xff] %vm1375, %v1337
        %1403 = vst.msk [vmem:[#allocation2 + $0xd8] sm:$0xff] %vm1375, %v1338
        %1404 = vst.msk [vmem:[#allocation2 + $0xe0] sm:$0xff] %vm1375, %v1339
        %1405 = vst.msk [vmem:[#allocation2 + $0xe8] sm:$0xff] %vm1375, %v1340
        %1406 = vst.msk [vmem:[#allocation2 + $0xf0] sm:$0xff] %vm1375, %v1341
        %1407 = vst.msk [vmem:[#allocation2 + $0xf8] sm:$0xff] %vm1375, %v1342
        %1408 = vst.msk [vmem:[#allocation2 + $0x100] sm:$0xff] %vm1375, %v1343
        %1409 = vst.msk [vmem:[#allocation2 + $0x108] sm:$0xff] %vm1375, %v1344
        %1410 = vst.msk [vmem:[#allocation2 + $0x110] sm:$0xff] %vm1375, %v1345
        %1411 = vst.msk [vmem:[#allocation2 + $0x118] sm:$0xff] %vm1375, %v1346
        %1412 = vst.msk [vmem:[#allocation2 + $0x120] sm:$0xff] %vm1375, %v1347
        %1413 = vst.msk [vmem:[#allocation2 + $0x128] sm:$0xff] %vm1375, %v1348
        %1414 = vst.msk [vmem:[#allocation2 + $0x130] sm:$0xff] %vm1375, %v1349
        %1415 = vst.msk [vmem:[#allocation2 + $0x138] sm:$0xff] %vm1375, %v1350
        %1416 = vst.msk [vmem:[#allocation2 + $0x140] sm:$0xff] %vm1375, %v1351
        %1417 = vst.msk [vmem:[#allocation2 + $0x148] sm:$0xff] %vm1375, %v1352
        %1418 = vst.msk [vmem:[#allocation2 + $0x150] sm:$0xff] %vm1375, %v1353
        %1419 = vst.msk [vmem:[#allocation2 + $0x158] sm:$0xff] %vm1375, %v1354
        %1420 = vst.msk [vmem:[#allocation2 + $0x160] sm:$0xff] %vm1375, %v1355
        %1421 = vst.msk [vmem:[#allocation2 + $0x168] sm:$0xff] %vm1375, %v1356
        %1422 = vst.msk [vmem:[#allocation2 + $0x170] sm:$0xff] %vm1375, %v1357
        %1423 = vst.msk [vmem:[#allocation2 + $0x178] sm:$0xff] %vm1375, %v1358
        %1424 = vst.msk [vmem:[#allocation2 + $0x180] sm:$0xff] %vm1375, %v1359
        %1425 = vst.msk [vmem:[#allocation2 + $0x188] sm:$0xff] %vm1375, %v1360
        %1426 = vst.msk [vmem:[#allocation2 + $0x190] sm:$0xff] %vm1375, %v1361
        %1427 = vst.msk [vmem:[#allocation2 + $0x198] sm:$0xff] %vm1375, %v1362
        %1428 = vst.msk [vmem:[#allocation2 + $0x1a0] sm:$0xff] %vm1375, %v1363
        %1429 = vst.msk [vmem:[#allocation2 + $0x1a8] sm:$0xff] %vm1375, %v1364
        %1430 = vst.msk [vmem:[#allocation2 + $0x1b0] sm:$0xff] %vm1375, %v1365
        %1431 = vst.msk [vmem:[#allocation2 + $0x1b8] sm:$0xff] %vm1375, %v1366
        %1432 = vst.msk [vmem:[#allocation2 + $0x1c0] sm:$0xff] %vm1375, %v1367
        %1433 = vst.msk [vmem:[#allocation2 + $0x1c8] sm:$0xff] %vm1375, %v1368
        %1434 = vst.msk [vmem:[#allocation2 + $0x1d0] sm:$0xff] %vm1375, %v1369
        %1435 = vst.msk [vmem:[#allocation2 + $0x1d8] sm:$0xff] %vm1375, %v1370
        %1436 = vst.msk [vmem:[#allocation2 + $0x1e0] sm:$0xff] %vm1375, %v1371
        %1437 = vst.msk [vmem:[#allocation2 + $0x1e8] sm:$0xff] %vm1375, %v1372
        %1438 = vst.msk [vmem:[#allocation2 + $0x1f0] sm:$0xff] %vm1375, %v1373
        %1439 = vst.msk [vmem:[#allocation2 + $0x1f8] sm:$0xff] %vm1375, %v1374
        // Predicated region
        $region37: #{conv_spatial_strided.1} parent=31 // pred_check
          %p1440 = pneg %p308
        $region38: #{conv_spatial_strided.1} parent=31 // pred_check_branch
          %1442 = sbr.rel (%p1440) target = $region40
        $region39: #{conv_spatial_strided.1} parent=31 // pred_region
          %v1443 = vld [vmem:[#allocation2] sm:$0xff]
          %v1444 = vld [vmem:[#allocation2 + $0x8] sm:$0xff]
          %v1445 = vld [vmem:[#allocation2 + $0x10] sm:$0xff]
          %v1446 = vld [vmem:[#allocation2 + $0x18] sm:$0xff]
          %v1447 = vld [vmem:[#allocation2 + $0x20] sm:$0xff]
          %v1448 = vld [vmem:[#allocation2 + $0x28] sm:$0xff]
          %v1449 = vld [vmem:[#allocation2 + $0x30] sm:$0xff]
          %v1450 = vld [vmem:[#allocation2 + $0x38] sm:$0xff]
          %v1451 = vld [vmem:[#allocation2 + $0x40] sm:$0xff]
          %v1452 = vld [vmem:[#allocation2 + $0x48] sm:$0xff]
          %v1453 = vld [vmem:[#allocation2 + $0x50] sm:$0xff]
          %v1454 = vld [vmem:[#allocation2 + $0x58] sm:$0xff]
          %v1455 = vld [vmem:[#allocation2 + $0x60] sm:$0xff]
          %v1456 = vld [vmem:[#allocation2 + $0x68] sm:$0xff]
          %v1457 = vld [vmem:[#allocation2 + $0x70] sm:$0xff]
          %v1458 = vld [vmem:[#allocation2 + $0x78] sm:$0xff]
          %v1459 = vld [vmem:[#allocation2 + $0x80] sm:$0xff]
          %v1460 = vld [vmem:[#allocation2 + $0x88] sm:$0xff]
          %v1461 = vld [vmem:[#allocation2 + $0x90] sm:$0xff]
          %v1462 = vld [vmem:[#allocation2 + $0x98] sm:$0xff]
          %v1463 = vld [vmem:[#allocation2 + $0xa0] sm:$0xff]
          %v1464 = vld [vmem:[#allocation2 + $0xa8] sm:$0xff]
          %v1465 = vld [vmem:[#allocation2 + $0xb0] sm:$0xff]
          %v1466 = vld [vmem:[#allocation2 + $0xb8] sm:$0xff]
          %v1467 = vld [vmem:[#allocation2 + $0xc0] sm:$0xff]
          %v1468 = vld [vmem:[#allocation2 + $0xc8] sm:$0xff]
          %v1469 = vld [vmem:[#allocation2 + $0xd0] sm:$0xff]
          %v1470 = vld [vmem:[#allocation2 + $0xd8] sm:$0xff]
          %v1471 = vld [vmem:[#allocation2 + $0xe0] sm:$0xff]
          %v1472 = vld [vmem:[#allocation2 + $0xe8] sm:$0xff]
          %v1473 = vld [vmem:[#allocation2 + $0xf0] sm:$0xff]
          %v1474 = vld [vmem:[#allocation2 + $0xf8] sm:$0xff]
          %v1475 = vld [vmem:[#allocation2 + $0x100] sm:$0xff]
          %v1476 = vld [vmem:[#allocation2 + $0x108] sm:$0xff]
          %v1477 = vld [vmem:[#allocation2 + $0x110] sm:$0xff]
          %v1478 = vld [vmem:[#allocation2 + $0x118] sm:$0xff]
          %v1479 = vld [vmem:[#allocation2 + $0x120] sm:$0xff]
          %v1480 = vld [vmem:[#allocation2 + $0x128] sm:$0xff]
          %v1481 = vld [vmem:[#allocation2 + $0x130] sm:$0xff]
          %v1482 = vld [vmem:[#allocation2 + $0x138] sm:$0xff]
          %v1483 = vld [vmem:[#allocation2 + $0x140] sm:$0xff]
          %v1484 = vld [vmem:[#allocation2 + $0x148] sm:$0xff]
          %v1485 = vld [vmem:[#allocation2 + $0x150] sm:$0xff]
          %v1486 = vld [vmem:[#allocation2 + $0x158] sm:$0xff]
          %v1487 = vld [vmem:[#allocation2 + $0x160] sm:$0xff]
          %v1488 = vld [vmem:[#allocation2 + $0x168] sm:$0xff]
          %v1489 = vld [vmem:[#allocation2 + $0x170] sm:$0xff]
          %v1490 = vld [vmem:[#allocation2 + $0x178] sm:$0xff]
          %v1491 = vld [vmem:[#allocation2 + $0x180] sm:$0xff]
          %v1492 = vld [vmem:[#allocation2 + $0x188] sm:$0xff]
          %v1493 = vld [vmem:[#allocation2 + $0x190] sm:$0xff]
          %v1494 = vld [vmem:[#allocation2 + $0x198] sm:$0xff]
          %v1495 = vld [vmem:[#allocation2 + $0x1a0] sm:$0xff]
          %v1496 = vld [vmem:[#allocation2 + $0x1a8] sm:$0xff]
          %v1497 = vld [vmem:[#allocation2 + $0x1b0] sm:$0xff]
          %v1498 = vld [vmem:[#allocation2 + $0x1b8] sm:$0xff]
          %v1499 = vld [vmem:[#allocation2 + $0x1c0] sm:$0xff]
          %v1500 = vld [vmem:[#allocation2 + $0x1c8] sm:$0xff]
          %v1501 = vld [vmem:[#allocation2 + $0x1d0] sm:$0xff]
          %v1502 = vld [vmem:[#allocation2 + $0x1d8] sm:$0xff]
          %v1503 = vld [vmem:[#allocation2 + $0x1e0] sm:$0xff]
          %v1504 = vld [vmem:[#allocation2 + $0x1e8] sm:$0xff]
          %v1505 = vld [vmem:[#allocation2 + $0x1f0] sm:$0xff]
          %v1506 = vld [vmem:[#allocation2 + $0x1f8] sm:$0xff]
          %v1507 = vld [vmem:[%s305] sm:$0x1]
          %v1509 = vperm.slane %v1507, 0
          %v1511 = vadd.f32 %v1443, %v1509
          %v1512 = vadd.f32 %v1444, %v1509
          %v1513 = vadd.f32 %v1445, %v1509
          %v1514 = vadd.f32 %v1446, %v1509
          %v1515 = vadd.f32 %v1447, %v1509
          %v1516 = vadd.f32 %v1448, %v1509
          %v1517 = vadd.f32 %v1449, %v1509
          %v1518 = vadd.f32 %v1450, %v1509
          %v1519 = vadd.f32 %v1451, %v1509
          %v1520 = vadd.f32 %v1452, %v1509
          %v1521 = vadd.f32 %v1453, %v1509
          %v1522 = vadd.f32 %v1454, %v1509
          %v1523 = vadd.f32 %v1455, %v1509
          %v1524 = vadd.f32 %v1456, %v1509
          %v1525 = vadd.f32 %v1457, %v1509
          %v1526 = vadd.f32 %v1458, %v1509
          %v1527 = vadd.f32 %v1459, %v1509
          %v1528 = vadd.f32 %v1460, %v1509
          %v1529 = vadd.f32 %v1461, %v1509
          %v1530 = vadd.f32 %v1462, %v1509
          %v1531 = vadd.f32 %v1463, %v1509
          %v1532 = vadd.f32 %v1464, %v1509
          %v1533 = vadd.f32 %v1465, %v1509
          %v1534 = vadd.f32 %v1466, %v1509
          %v1535 = vadd.f32 %v1467, %v1509
          %v1536 = vadd.f32 %v1468, %v1509
          %v1537 = vadd.f32 %v1469, %v1509
          %v1538 = vadd.f32 %v1470, %v1509
          %v1539 = vadd.f32 %v1471, %v1509
          %v1540 = vadd.f32 %v1472, %v1509
          %v1541 = vadd.f32 %v1473, %v1509
          %v1542 = vadd.f32 %v1474, %v1509
          %v1543 = vadd.f32 %v1475, %v1509
          %v1544 = vadd.f32 %v1476, %v1509
          %v1545 = vadd.f32 %v1477, %v1509
          %v1546 = vadd.f32 %v1478, %v1509
          %v1547 = vadd.f32 %v1479, %v1509
          %v1548 = vadd.f32 %v1480, %v1509
          %v1549 = vadd.f32 %v1481, %v1509
          %v1550 = vadd.f32 %v1482, %v1509
          %v1551 = vadd.f32 %v1483, %v1509
          %v1552 = vadd.f32 %v1484, %v1509
          %v1553 = vadd.f32 %v1485, %v1509
          %v1554 = vadd.f32 %v1486, %v1509
          %v1555 = vadd.f32 %v1487, %v1509
          %v1556 = vadd.f32 %v1488, %v1509
          %v1557 = vadd.f32 %v1489, %v1509
          %v1558 = vadd.f32 %v1490, %v1509
          %v1559 = vadd.f32 %v1491, %v1509
          %v1560 = vadd.f32 %v1492, %v1509
          %v1561 = vadd.f32 %v1493, %v1509
          %v1562 = vadd.f32 %v1494, %v1509
          %v1563 = vadd.f32 %v1495, %v1509
          %v1564 = vadd.f32 %v1496, %v1509
          %v1565 = vadd.f32 %v1497, %v1509
          %v1566 = vadd.f32 %v1498, %v1509
          %v1567 = vadd.f32 %v1499, %v1509
          %v1568 = vadd.f32 %v1500, %v1509
          %v1569 = vadd.f32 %v1501, %v1509
          %v1570 = vadd.f32 %v1502, %v1509
          %v1571 = vadd.f32 %v1503, %v1509
          %v1572 = vadd.f32 %v1504, %v1509
          %v1573 = vadd.f32 %v1505, %v1509
          %v1574 = vadd.f32 %v1506, %v1509
          %v1575 = vmax.f32 %v1511, 0.0
          %v1576 = vmax.f32 %v1512, 0.0
          %v1577 = vmax.f32 %v1513, 0.0
          %v1578 = vmax.f32 %v1514, 0.0
          %v1579 = vmax.f32 %v1515, 0.0
          %v1580 = vmax.f32 %v1516, 0.0
          %v1581 = vmax.f32 %v1517, 0.0
          %v1582 = vmax.f32 %v1518, 0.0
          %v1583 = vmax.f32 %v1519, 0.0
          %v1584 = vmax.f32 %v1520, 0.0
          %v1585 = vmax.f32 %v1521, 0.0
          %v1586 = vmax.f32 %v1522, 0.0
          %v1587 = vmax.f32 %v1523, 0.0
          %v1588 = vmax.f32 %v1524, 0.0
          %v1589 = vmax.f32 %v1525, 0.0
          %v1590 = vmax.f32 %v1526, 0.0
          %v1591 = vmax.f32 %v1527, 0.0
          %v1592 = vmax.f32 %v1528, 0.0
          %v1593 = vmax.f32 %v1529, 0.0
          %v1594 = vmax.f32 %v1530, 0.0
          %v1595 = vmax.f32 %v1531, 0.0
          %v1596 = vmax.f32 %v1532, 0.0
          %v1597 = vmax.f32 %v1533, 0.0
          %v1598 = vmax.f32 %v1534, 0.0
          %v1599 = vmax.f32 %v1535, 0.0
          %v1600 = vmax.f32 %v1536, 0.0
          %v1601 = vmax.f32 %v1537, 0.0
          %v1602 = vmax.f32 %v1538, 0.0
          %v1603 = vmax.f32 %v1539, 0.0
          %v1604 = vmax.f32 %v1540, 0.0
          %v1605 = vmax.f32 %v1541, 0.0
          %v1606 = vmax.f32 %v1542, 0.0
          %v1607 = vmax.f32 %v1543, 0.0
          %v1608 = vmax.f32 %v1544, 0.0
          %v1609 = vmax.f32 %v1545, 0.0
          %v1610 = vmax.f32 %v1546, 0.0
          %v1611 = vmax.f32 %v1547, 0.0
          %v1612 = vmax.f32 %v1548, 0.0
          %v1613 = vmax.f32 %v1549, 0.0
          %v1614 = vmax.f32 %v1550, 0.0
          %v1615 = vmax.f32 %v1551, 0.0
          %v1616 = vmax.f32 %v1552, 0.0
          %v1617 = vmax.f32 %v1553, 0.0
          %v1618 = vmax.f32 %v1554, 0.0
          %v1619 = vmax.f32 %v1555, 0.0
          %v1620 = vmax.f32 %v1556, 0.0
          %v1621 = vmax.f32 %v1557, 0.0
          %v1622 = vmax.f32 %v1558, 0.0
          %v1623 = vmax.f32 %v1559, 0.0
          %v1624 = vmax.f32 %v1560, 0.0
          %v1625 = vmax.f32 %v1561, 0.0
          %v1626 = vmax.f32 %v1562, 0.0
          %v1627 = vmax.f32 %v1563, 0.0
          %v1628 = vmax.f32 %v1564, 0.0
          %v1629 = vmax.f32 %v1565, 0.0
          %v1630 = vmax.f32 %v1566, 0.0
          %v1631 = vmax.f32 %v1567, 0.0
          %v1632 = vmax.f32 %v1568, 0.0
          %v1633 = vmax.f32 %v1569, 0.0
          %v1634 = vmax.f32 %v1570, 0.0
          %v1635 = vmax.f32 %v1571, 0.0
          %v1636 = vmax.f32 %v1572, 0.0
          %v1637 = vmax.f32 %v1573, 0.0
          %v1638 = vmax.f32 %v1574, 0.0
          %v1639 = vpack.c.bf16 %v1575, %v1575
          %v1640 = vpack.c.bf16 %v1576, %v1576
          %v1641 = vpack.c.bf16 %v1577, %v1577
          %v1642 = vpack.c.bf16 %v1578, %v1578
          %v1643 = vpack.c.bf16 %v1579, %v1579
          %v1644 = vpack.c.bf16 %v1580, %v1580
          %v1645 = vpack.c.bf16 %v1581, %v1581
          %v1646 = vpack.c.bf16 %v1582, %v1582
          %v1647 = vpack.c.bf16 %v1583, %v1583
          %v1648 = vpack.c.bf16 %v1584, %v1584
          %v1649 = vpack.c.bf16 %v1585, %v1585
          %v1650 = vpack.c.bf16 %v1586, %v1586
          %v1651 = vpack.c.bf16 %v1587, %v1587
          %v1652 = vpack.c.bf16 %v1588, %v1588
          %v1653 = vpack.c.bf16 %v1589, %v1589
          %v1654 = vpack.c.bf16 %v1590, %v1590
          %v1655 = vpack.c.bf16 %v1591, %v1591
          %v1656 = vpack.c.bf16 %v1592, %v1592
          %v1657 = vpack.c.bf16 %v1593, %v1593
          %v1658 = vpack.c.bf16 %v1594, %v1594
          %v1659 = vpack.c.bf16 %v1595, %v1595
          %v1660 = vpack.c.bf16 %v1596, %v1596
          %v1661 = vpack.c.bf16 %v1597, %v1597
          %v1662 = vpack.c.bf16 %v1598, %v1598
          %v1663 = vpack.c.bf16 %v1599, %v1599
          %v1664 = vpack.c.bf16 %v1600, %v1600
          %v1665 = vpack.c.bf16 %v1601, %v1601
          %v1666 = vpack.c.bf16 %v1602, %v1602
          %v1667 = vpack.c.bf16 %v1603, %v1603
          %v1668 = vpack.c.bf16 %v1604, %v1604
          %v1669 = vpack.c.bf16 %v1605, %v1605
          %v1670 = vpack.c.bf16 %v1606, %v1606
          %v1671 = vpack.c.bf16 %v1607, %v1607
          %v1672 = vpack.c.bf16 %v1608, %v1608
          %v1673 = vpack.c.bf16 %v1609, %v1609
          %v1674 = vpack.c.bf16 %v1610, %v1610
          %v1675 = vpack.c.bf16 %v1611, %v1611
          %v1676 = vpack.c.bf16 %v1612, %v1612
          %v1677 = vpack.c.bf16 %v1613, %v1613
          %v1678 = vpack.c.bf16 %v1614, %v1614
          %v1679 = vpack.c.bf16 %v1615, %v1615
          %v1680 = vpack.c.bf16 %v1616, %v1616
          %v1681 = vpack.c.bf16 %v1617, %v1617
          %v1682 = vpack.c.bf16 %v1618, %v1618
          %v1683 = vpack.c.bf16 %v1619, %v1619
          %v1684 = vpack.c.bf16 %v1620, %v1620
          %v1685 = vpack.c.bf16 %v1621, %v1621
          %v1686 = vpack.c.bf16 %v1622, %v1622
          %v1687 = vpack.c.bf16 %v1623, %v1623
          %v1688 = vpack.c.bf16 %v1624, %v1624
          %v1689 = vpack.c.bf16 %v1625, %v1625
          %v1690 = vpack.c.bf16 %v1626, %v1626
          %v1691 = vpack.c.bf16 %v1627, %v1627
          %v1692 = vpack.c.bf16 %v1628, %v1628
          %v1693 = vpack.c.bf16 %v1629, %v1629
          %v1694 = vpack.c.bf16 %v1630, %v1630
          %v1695 = vpack.c.bf16 %v1631, %v1631
          %v1696 = vpack.c.bf16 %v1632, %v1632
          %v1697 = vpack.c.bf16 %v1633, %v1633
          %v1698 = vpack.c.bf16 %v1634, %v1634
          %v1699 = vpack.c.bf16 %v1635, %v1635
          %v1700 = vpack.c.bf16 %v1636, %v1636
          %v1701 = vpack.c.bf16 %v1637, %v1637
          %v1702 = vpack.c.bf16 %v1638, %v1638
          %vm1703 = vcmask 519168
          %1704 = vst.msk [vmem:[%s270] sm:$0xf] %vm1703, %v1639
          %1705 = vst.msk [vmem:[%s270 + $0x4] sm:$0xf] %vm1703, %v1640
          %1706 = vst.msk [vmem:[%s270 + $0x8] sm:$0xf] %vm1703, %v1641
          %1707 = vst.msk [vmem:[%s270 + $0xc] sm:$0xf] %vm1703, %v1642
          %1708 = vst.msk [vmem:[%s270 + $0x10] sm:$0xf] %vm1703, %v1643
          %1709 = vst.msk [vmem:[%s270 + $0x14] sm:$0xf] %vm1703, %v1644
          %1710 = vst.msk [vmem:[%s270 + $0x18] sm:$0xf] %vm1703, %v1645
          %1711 = vst.msk [vmem:[%s270 + $0x1c] sm:$0xf] %vm1703, %v1646
          %1712 = vst.msk [vmem:[%s270 + $0x20] sm:$0xf] %vm1703, %v1647
          %1713 = vst.msk [vmem:[%s270 + $0x24] sm:$0xf] %vm1703, %v1648
          %1714 = vst.msk [vmem:[%s270 + $0x28] sm:$0xf] %vm1703, %v1649
          %1715 = vst.msk [vmem:[%s270 + $0x2c] sm:$0xf] %vm1703, %v1650
          %1716 = vst.msk [vmem:[%s270 + $0x30] sm:$0xf] %vm1703, %v1651
          %1717 = vst.msk [vmem:[%s270 + $0x34] sm:$0xf] %vm1703, %v1652
          %1718 = vst.msk [vmem:[%s270 + $0x38] sm:$0xf] %vm1703, %v1653
          %1719 = vst.msk [vmem:[%s270 + $0x3c] sm:$0xf] %vm1703, %v1654
          %1720 = vst.msk [vmem:[%s270 + $0x40] sm:$0xf] %vm1703, %v1655
          %1721 = vst.msk [vmem:[%s270 + $0x44] sm:$0xf] %vm1703, %v1656
          %1722 = vst.msk [vmem:[%s270 + $0x48] sm:$0xf] %vm1703, %v1657
          %1723 = vst.msk [vmem:[%s270 + $0x4c] sm:$0xf] %vm1703, %v1658
          %1724 = vst.msk [vmem:[%s270 + $0x50] sm:$0xf] %vm1703, %v1659
          %1725 = vst.msk [vmem:[%s270 + $0x54] sm:$0xf] %vm1703, %v1660
          %1726 = vst.msk [vmem:[%s270 + $0x58] sm:$0xf] %vm1703, %v1661
          %1727 = vst.msk [vmem:[%s270 + $0x5c] sm:$0xf] %vm1703, %v1662
          %1728 = vst.msk [vmem:[%s270 + $0x60] sm:$0xf] %vm1703, %v1663
          %1729 = vst.msk [vmem:[%s270 + $0x64] sm:$0xf] %vm1703, %v1664
          %1730 = vst.msk [vmem:[%s270 + $0x68] sm:$0xf] %vm1703, %v1665
          %1731 = vst.msk [vmem:[%s270 + $0x6c] sm:$0xf] %vm1703, %v1666
          %1732 = vst.msk [vmem:[%s270 + $0x70] sm:$0xf] %vm1703, %v1667
          %1733 = vst.msk [vmem:[%s270 + $0x74] sm:$0xf] %vm1703, %v1668
          %1734 = vst.msk [vmem:[%s270 + $0x78] sm:$0xf] %vm1703, %v1669
          %1735 = vst.msk [vmem:[%s270 + $0x7c] sm:$0xf] %vm1703, %v1670
          %1736 = vst.msk [vmem:[%s270 + $0x80] sm:$0xf] %vm1703, %v1671
          %1737 = vst.msk [vmem:[%s270 + $0x84] sm:$0xf] %vm1703, %v1672
          %1738 = vst.msk [vmem:[%s270 + $0x88] sm:$0xf] %vm1703, %v1673
          %1739 = vst.msk [vmem:[%s270 + $0x8c] sm:$0xf] %vm1703, %v1674
          %1740 = vst.msk [vmem:[%s270 + $0x90] sm:$0xf] %vm1703, %v1675
          %1741 = vst.msk [vmem:[%s270 + $0x94] sm:$0xf] %vm1703, %v1676
          %1742 = vst.msk [vmem:[%s270 + $0x98] sm:$0xf] %vm1703, %v1677
          %1743 = vst.msk [vmem:[%s270 + $0x9c] sm:$0xf] %vm1703, %v1678
          %1744 = vst.msk [vmem:[%s270 + $0xa0] sm:$0xf] %vm1703, %v1679
          %1745 = vst.msk [vmem:[%s270 + $0xa4] sm:$0xf] %vm1703, %v1680
          %1746 = vst.msk [vmem:[%s270 + $0xa8] sm:$0xf] %vm1703, %v1681
          %1747 = vst.msk [vmem:[%s270 + $0xac] sm:$0xf] %vm1703, %v1682
          %1748 = vst.msk [vmem:[%s270 + $0xb0] sm:$0xf] %vm1703, %v1683
          %1749 = vst.msk [vmem:[%s270 + $0xb4] sm:$0xf] %vm1703, %v1684
          %1750 = vst.msk [vmem:[%s270 + $0xb8] sm:$0xf] %vm1703, %v1685
          %1751 = vst.msk [vmem:[%s270 + $0xbc] sm:$0xf] %vm1703, %v1686
          %1752 = vst.msk [vmem:[%s270 + $0xc0] sm:$0xf] %vm1703, %v1687
          %1753 = vst.msk [vmem:[%s270 + $0xc4] sm:$0xf] %vm1703, %v1688
          %1754 = vst.msk [vmem:[%s270 + $0xc8] sm:$0xf] %vm1703, %v1689
          %1755 = vst.msk [vmem:[%s270 + $0xcc] sm:$0xf] %vm1703, %v1690
          %1756 = vst.msk [vmem:[%s270 + $0xd0] sm:$0xf] %vm1703, %v1691
          %1757 = vst.msk [vmem:[%s270 + $0xd4] sm:$0xf] %vm1703, %v1692
          %1758 = vst.msk [vmem:[%s270 + $0xd8] sm:$0xf] %vm1703, %v1693
          %1759 = vst.msk [vmem:[%s270 + $0xdc] sm:$0xf] %vm1703, %v1694
          %1760 = vst.msk [vmem:[%s270 + $0xe0] sm:$0xf] %vm1703, %v1695
          %1761 = vst.msk [vmem:[%s270 + $0xe4] sm:$0xf] %vm1703, %v1696
          %1762 = vst.msk [vmem:[%s270 + $0xe8] sm:$0xf] %vm1703, %v1697
          %1763 = vst.msk [vmem:[%s270 + $0xec] sm:$0xf] %vm1703, %v1698
          %1764 = vst.msk [vmem:[%s270 + $0xf0] sm:$0xf] %vm1703, %v1699
          %1765 = vst.msk [vmem:[%s270 + $0xf4] sm:$0xf] %vm1703, %v1700
          %1766 = vst.msk [vmem:[%s270 + $0xf8] sm:$0xf] %vm1703, %v1701
          %1767 = vst.msk [vmem:[%s270 + $0xfc] sm:$0xf] %vm1703, %v1702
        $region40: #{conv_spatial_strided.1} parent=31 // pred_fallthru
          _
        %s1768 = sand.u32 %s143, 1
        %s1769 = scalar_lea.sflag [#allocation4], %s1768
        %s1770 = sand.u32 %s143, 1
        %s1771 = smul.addr %s1770, 256
        %s1772 = scalar_lea.vmem [#allocation3], %s1771
        // Predicated region
        $region41: #{conv_spatial_strided.1} parent=31 // pred_check
          %p1773 = pneg %p153
        $region42: #{conv_spatial_strided.1} parent=31 // pred_check_branch
          %1775 = sbr.rel (%p1773) target = $region44
        $region43: #{conv_spatial_strided.1} parent=31 // pred_region
          %s1776 = smul.u32 64, %s24
          %1778 = vsyncadd %s1769, 0
          %s1779 = sadd.s32 %s25, %s1776
          %s1780 = smul.addr %s23, 256
          %s1781 = sadd.s32 %s1779, %s1780
          %s1782 = smul.addr %s1781, 4
          %s1783 = scalar_lea.hbm %s3, %s1782
          %s1784 = sshll.u32 %s1772, 4
          %s1785 = int_to_ptr.vmem [resolvable:$true] %s1784
          %s1786 = sshll.u32 %s1783, 4
          %s1787 = int_to_ptr.hbm [resolvable:$true] %s1786
          %1792 = dma.vmem_to_hbm [thread:$0]  %s1785, 4096, %s1787, %s1769, 64, 64, 4
        $region44: #{conv_spatial_strided.1} parent=31 // pred_fallthru
          _
      $region32: #{conv_spatial_strided.1} parent=5 // pred_fallthru
        _
      %p1793 = scmp.le.s32.totalorder 2, %s12
      // Predicated region
      $region45: #{conv_spatial_strided.1} parent=5 // pred_check
        %p1794 = pneg %p1793
      $region46: #{conv_spatial_strided.1} parent=5 // pred_check_branch
        %1796 = sbr.rel (%p1794) target = $region48
      $region47: #{conv_spatial_strided.1} parent=5 // pred_region
        %s1797 = ssub.s32 %s12, 2
        // Predicated region
        $region49: #{conv_spatial_strided.1} parent=47 // pred_check
          %p1798 = pneg %p159
        $region50: #{conv_spatial_strided.1} parent=47 // pred_check_branch
          %1800 = sbr.rel (%p1798) target = $region52
        $region51: #{conv_spatial_strided.1} parent=47 // pred_region
          %s1801 = sand.u32 %s144, 1
          %s1802 = scalar_lea.sflag [#allocation4], %s1801
          %s1803 = sand.u32 %s144, 1
          %s1804 = smul.addr %s1803, 256
          %s1805 = scalar_lea.vmem [#allocation3], %s1804
          %1807 = dma.done %s1802, 4096
        $region52: #{conv_spatial_strided.1} parent=47 // pred_fallthru
          _
      $region48: #{conv_spatial_strided.1} parent=5 // pred_fallthru
        _
    $region6: #{conv_spatial_strided.1} parent=1 // loop_footer
      %s16 = sadd.s32 1, %s12
    $region7: #{conv_spatial_strided.1} parent=1 // loop_footer_branch
      %11 = sbr.rel target = $region3
    $region8: #{conv_spatial_strided.1} parent=1 // loop_exit
      _
    %1808 = vsyncpa [#allocation4], 1
    %s1809 = scalar_lea.sflag [#allocation4], 1
    %1810 = vsyncpa %s1809, 1

</llo_original>
